<compile_context>
chip_gen: v7x
topology: tpu7x:2x2x1
jax: 0.10.0
libtpu: 0.0.40
codegen_flags: <defaults>
</compile_context>

<pallas_src>
import math

import jax
import jax.numpy as jnp
from jax.experimental import pallas as pl
from jax.experimental.pallas import tpu as pltpu


def _round_up(a, b):
    return -(-a // b) * b


# ----------------------------- Pallas kernels ------------------------------ #

def embed_head_kernel(fea_ref, coord_ref, w1f_ref, w1c_ref, b1_ref,
                      w2_ref, b2_ref, woff_ref, boff_ref, wrt_ref, brt_ref,
                      off_ref, rout_ref):
    """Packed per-pixel MLP body + fused offset / routing heads.

    fea_ref   : (T, pack*c)   bf16
    coord_ref : (T, pack*4)   bf16
    off_ref   : (T, pack*2)   f32   per-pixel [off_x, off_y]
    rout_ref  : (T, pack*E)   bf16  per-pixel sigmoid routing weights
    """
    h1 = jnp.dot(fea_ref[...], w1f_ref[...], preferred_element_type=jnp.float32)
    h1 = h1 + jnp.dot(coord_ref[...], w1c_ref[...], preferred_element_type=jnp.float32)
    h1 = jnp.maximum(h1 + b1_ref[...], 0.0).astype(jnp.bfloat16)

    h2 = jnp.dot(h1, w2_ref[...], preferred_element_type=jnp.float32)
    h2 = jnp.maximum(h2 + b2_ref[...], 0.0).astype(jnp.bfloat16)

    off = jnp.dot(h2, woff_ref[...], preferred_element_type=jnp.float32)
    off_ref[...] = off + boff_ref[...]

    r = jnp.dot(h2, wrt_ref[...], preferred_element_type=jnp.float32) + brt_ref[...]
    rout_ref[...] = (1.0 / (1.0 + jnp.exp(-r))).astype(jnp.bfloat16)   # exact sigmoid


def expert_mix_kernel(fea_ref, rout_ref, rrep_ref, wc_ref, msum_ref, we_ref, out_ref):
    """out[p] = (sum_f r_f WE_f) @ (sum_e r_e WC_e) @ fea[p] + fea[p], packed.

    fea_ref  : (T, pack*c)            bf16
    rout_ref : (T, pack*E)            bf16
    rrep_ref : (pack*E, pack*E*cr)    bf16 0/1 repeat matrix (r_e -> r_e per cr lane)
    wc_ref   : (pack*c, pack*E*cr)    bf16 kron(I, [WC_1^T|..|WC_E^T])
    msum_ref : (pack*E*cr, pack*E*cr) bf16 0/1 "sum over experts, replicate" matrix
    we_ref   : (pack*E*cr, pack*c)    bf16 kron(I, vstack(WE_e^T))
    """
    r_rep = jnp.dot(rout_ref[...], rrep_ref[...],
                    preferred_element_type=jnp.float32)                 # (T, pack*E*cr)
    y = jnp.dot(fea_ref[...], wc_ref[...],
                preferred_element_type=jnp.float32)                     # per-expert compress
    comp = jnp.dot((y * r_rep).astype(jnp.bfloat16), msum_ref[...],
                   preferred_element_type=jnp.float32)                  # sum_e r_e WC_e@fea (replicated)
    z = (comp * r_rep).astype(jnp.bfloat16)                             # [r_1*comp | .. | r_E*comp]
    out = jnp.dot(z, we_ref[...], preferred_element_type=jnp.float32)   # sum_f r_f WE_f @ comp
    out_ref[...] = out + fea_ref[...].astype(jnp.float32)               # residual (re-read, short live range)


# ------------------------------ plain-JAX glue ------------------------------ #

def base_grid(b, h, w, scale, outH, outW):
    """Normalized grid exactly as in grid_sample() (before optional offset)."""
    jx = jnp.arange(outW, dtype=jnp.float32)
    iy = jnp.arange(outH, dtype=jnp.float32)
    gx = ((jx + 0.5) / scale - 0.5) * 2.0 / (w - 1) - 1.0
    gy = ((iy + 0.5) / scale - 0.5) * 2.0 / (h - 1) - 1.0
    gx = jnp.broadcast_to(gx[None, None, :], (b, outH, outW))
    gy = jnp.broadcast_to(gy[None, :, None], (b, outH, outW))
    return gx, gy


def grid_sample_bilinear_nhwc(x_hwc, gx, gy, H, W):
    """F.grid_sample(bilinear, padding_mode='zeros', align_corners=False),
    channels-last: x_hwc (b, H*W, c), gx/gy (b, outH, outW) -> (b, outH*outW, c)."""
    # TODO(synk): data-dependent bilinear gather kept in plain JAX (no clean Pallas gather).
    b, _, c = x_hwc.shape
    ix = ((gx + 1.0) * W - 1.0) / 2.0
    iy = ((gy + 1.0) * H - 1.0) / 2.0
    x0 = jnp.floor(ix)
    y0 = jnp.floor(iy)
    x1 = x0 + 1.0
    y1 = y0 + 1.0
    wa = ((x1 - ix) * (y1 - iy)).reshape(b, -1, 1)
    wb = ((x1 - ix) * (iy - y0)).reshape(b, -1, 1)
    wc = ((ix - x0) * (y1 - iy)).reshape(b, -1, 1)
    wd = ((ix - x0) * (iy - y0)).reshape(b, -1, 1)

    def gather(xi, yi):
        valid = ((xi >= 0) & (xi <= W - 1) & (yi >= 0) & (yi <= H - 1)).reshape(b, -1, 1)
        xc = jnp.clip(xi, 0, W - 1).astype(jnp.int32)
        yc = jnp.clip(yi, 0, H - 1).astype(jnp.int32)
        idx = (yc * W + xc).reshape(b, -1, 1)
        g = jnp.take_along_axis(x_hwc, jnp.broadcast_to(idx, (b, idx.shape[1], c)), axis=1)
        return g * valid.astype(x_hwc.dtype)

    return (gather(x0, y0) * wa + gather(x0, y1) * wb
            + gather(x1, y0) * wc + gather(x1, y1) * wd)


def init_params(key, channels, num_experts):
    c = channels
    cr = c // 8
    cin = c + 4
    ks = jax.random.split(key, 10)

    def u(k, shape, fan_in):
        bound = 1.0 / math.sqrt(fan_in)
        return jax.random.uniform(k, shape, jnp.float32, -bound, bound)

    return dict(
        w1=u(ks[0], (c, cin), cin), b1=u(ks[1], (c,), cin),           # body conv1
        w2=u(ks[2], (c, c), c), b2=u(ks[3], (c,), c),                 # body conv2
        w_off=u(ks[4], (2, c), c), b_off=u(ks[5], (2,), c),           # offset head
        w_rout=u(ks[6], (num_experts, c), c), b_rout=u(ks[7], (num_experts,), c),
        weight_compress=u(ks[8], (num_experts, cr, c), c),            # (E, C//8, C)
        weight_expand=u(ks[9], (num_experts, c, cr), cr),             # (E, C, C//8)
    )


def scab_downsample_forward(x, scale, params, num_experts=4):
    b, c, h, w = x.shape
    E = num_experts
    cr = c // 8
    outH = int(math.ceil(h * scale))
    outW = int(math.ceil(w * scale))
    N = b * outH * outW

    # ---- pixel packing / padded tiling (no exact-divisibility requirement) ----
    pack = 128 // c if (c <= 128 and 128 % c == 0) else 1
    PC = pack * c                                  # packed channel lanes (128 when packable)
    rows = -(-N // pack)                           # packed rows needed
    # Cap TROW so the grid has >= 4 steps (v7x has 2 TCs); grow to 1024 for large N.
    TROW = max(8, min(1024, _round_up(-(-rows // 4), 8)))
    rows_pad = _round_up(rows, TROW)
    N_pad = rows_pad * pack
    grid = (rows_pad // TROW,)
    cparams = pltpu.CompilerParams(dimension_semantics=("parallel",),
                                   vmem_limit_bytes=32 * 1024 * 1024)

    # ---- coordinate channels, channels-last (order: 1/s, 1/s, coor_h, coor_w) ----
    iy = jnp.arange(outH, dtype=jnp.float32)
    jx = jnp.arange(outW, dtype=jnp.float32)
    coor_h = (iy + 0.5) / scale - jnp.floor((iy + 0.5) / scale + 0.001) - 0.5
    coor_w = (jx + 0.5) / scale - jnp.floor((jx + 0.5) / scale + 0.001) - 0.5
    inv_s = jnp.full((outH, outW), 1.0 / scale, jnp.float32)
    coord = jnp.stack([inv_s, inv_s,
                       jnp.broadcast_to(coor_h[:, None], (outH, outW)),
                       jnp.broadcast_to(coor_w[None, :], (outH, outW))], axis=-1)
    coord = jnp.broadcast_to(coord[None], (b, outH, outW, 4)).reshape(N, 4)

    # ---- first grid_sample, channels-last so no NHWC<->NCHW round trips ----
    x_hwc = x.transpose(0, 2, 3, 1).reshape(b, h * w, c)
    gx, gy = base_grid(b, h, w, scale, outH, outW)
    pre_fea = grid_sample_bilinear_nhwc(x_hwc, gx, gy, h, w).reshape(N, c)

    def pack_rows(a, width):                       # (N, width) -> (rows_pad, pack*width)
        a = jnp.pad(a, ((0, N_pad - N), (0, 0)))
        return a.reshape(rows_pad, pack * width)

    fea_p = pack_rows(pre_fea, c).astype(jnp.bfloat16)
    coord_p = pack_rows(coord, 4).astype(jnp.bfloat16)

    # ---- kernel-1 weights: block-diagonal over packed pixels, bf16 streams ----
    eye_p = jnp.eye(pack, dtype=jnp.float32)
    w1c = params["w1"][:, :4].T                                   # (4, c) acts on coord
    w1f = params["w1"][:, 4:].T                                   # (c, c) acts on pre_fea

    w1f_bd = jnp.kron(eye_p, w1f).astype(jnp.bfloat16)            # (PC, PC)
    w1c_bd = jnp.kron(eye_p, w1c).astype(jnp.bfloat16)            # (4*pack, PC)
    w2_bd = jnp.kron(eye_p, params["w2"].T).astype(jnp.bfloat16)  # (PC, PC)
    woff_bd = jnp.kron(eye_p, params["w_off"].T).astype(jnp.bfloat16)   # (PC, 2*pack)
    wrt_bd = jnp.kron(eye_p, params["w_rout"].T).astype(jnp.bfloat16)   # (PC, E*pack)
    b1_t = jnp.tile(params["b1"], pack)[None]                     # (1, PC) f32
    b2_t = jnp.tile(params["b2"], pack)[None]
    boff_t = jnp.tile(params["b_off"], pack)[None]                # (1, 2*pack) f32
    brt_t = jnp.tile(params["b_rout"], pack)[None]                # (1, E*pack) f32

    off_p, rout_p = pl.pallas_call(
        embed_head_kernel,
        out_shape=(jax.ShapeDtypeStruct((rows_pad, 2 * pack), jnp.float32),
                   jax.ShapeDtypeStruct((rows_pad, E * pack), jnp.bfloat16)),
        grid=grid,
        in_specs=[
            pl.BlockSpec((TROW, PC), lambda i: (i, 0)),
            pl.BlockSpec((TROW, 4 * pack), lambda i: (i, 0)),
            pl.BlockSpec((PC, PC), lambda i: (0, 0)),
            pl.BlockSpec((4 * pack, PC), lambda i: (0, 0)),
            pl.BlockSpec((1, PC), lambda i: (0, 0)),
            pl.BlockSpec((PC, PC), lambda i: (0, 0)),
            pl.BlockSpec((1, PC), lambda i: (0, 0)),
            pl.BlockSpec((PC, 2 * pack), lambda i: (0, 0)),
            pl.BlockSpec((1, 2 * pack), lambda i: (0, 0)),
            pl.BlockSpec((PC, E * pack), lambda i: (0, 0)),
            pl.BlockSpec((1, E * pack), lambda i: (0, 0)),
        ],
        out_specs=(pl.BlockSpec((TROW, 2 * pack), lambda i: (i, 0)),
                   pl.BlockSpec((TROW, E * pack), lambda i: (i, 0))),
        compiler_params=cparams,
    )(fea_p, coord_p, w1f_bd, w1c_bd, b1_t, w2_bd, b2_t,
      woff_bd, boff_t, wrt_bd, brt_t)

    offset = off_p.reshape(N_pad, 2)[:N].reshape(b, outH, outW, 2)   # f32 offsets

    # ---- second grid_sample with predicted offsets (glue gather) ----
    # TODO(synk): fea0 still makes one HBM round trip (XLA gather -> kernel 2);
    # fusing the gather into kernel 2 needs manual per-row DMA gathers.
    gx2 = gx + offset[..., 0] * (2.0 / (w - 1))
    gy2 = gy + offset[..., 1] * (2.0 / (h - 1))
    fea0 = grid_sample_bilinear_nhwc(x_hwc, gx2, gy2, h, w).reshape(N, c)
    fea0_p = pack_rows(fea0, c).astype(jnp.bfloat16)

    # ---- kernel-2 constants: concatenated experts + block-diag over pack (bf16) ----
    # WCcat[k, e*cr+j] = WC_e[j, k]   ;   WEcat[e*cr+j, m] = WE_e[m, j]
    wc_cat = params["weight_compress"].transpose(2, 0, 1).reshape(c, E * cr)
    we_cat = params["weight_expand"].transpose(0, 2, 1).reshape(E * cr, c)
    wc_bd = jnp.kron(eye_p, wc_cat).astype(jnp.bfloat16)          # (PC, pack*E*cr)
    we_bd = jnp.kron(eye_p, we_cat).astype(jnp.bfloat16)          # (pack*E*cr, PC)
    msum_bd = jnp.kron(eye_p, jnp.kron(jnp.ones((E, E), jnp.float32),
                                       jnp.eye(cr, dtype=jnp.float32))
                       ).astype(jnp.bfloat16)                     # sum over experts (0/1)
    rrep_bd = jnp.kron(eye_p, jnp.kron(jnp.eye(E, dtype=jnp.float32),
                                       jnp.ones((1, cr), jnp.float32))
                       ).astype(jnp.bfloat16)                     # repeat r_e x cr (0/1)
    ECR = pack * E * cr

    out_p = pl.pallas_call(
        expert_mix_kernel,
        out_shape=jax.ShapeDtypeStruct((rows_pad, PC), jnp.float32),
        grid=grid,
        in_specs=[
            pl.BlockSpec((TROW, PC), lambda i: (i, 0)),
            pl.BlockSpec((TROW, E * pack), lambda i: (i, 0)),
            pl.BlockSpec((E * pack, ECR), lambda i: (0, 0)),
            pl.BlockSpec((PC, ECR), lambda i: (0, 0)),
            pl.BlockSpec((ECR, ECR), lambda i: (0, 0)),
            pl.BlockSpec((ECR, PC), lambda i: (0, 0)),
        ],
        out_specs=pl.BlockSpec((TROW, PC), lambda i: (i, 0)),
        compiler_params=cparams,
    )(fea0_p, rout_p, rrep_bd, wc_bd, msum_bd, we_bd)

    out = out_p.reshape(N_pad, c)[:N].reshape(b, outH, outW, c)
    return out.transpose(0, 3, 1, 2)   # NCHW to match the PyTorch module output


if __name__ == "__main__":
    key = jax.random.PRNGKey(0)
    kx, kp = jax.random.split(key)

    b, c, h, w = 2, 32, 16, 16     # channels must be divisible by 8
    num_experts = 4
    scale = 0.5                    # downsample: output is 8x8

    x = jax.random.normal(kx, (b, c, h, w), jnp.float32)
    params = init_params(kp, c, num_experts)

    fwd = jax.jit(lambda xx, pp: scab_downsample_forward(xx, scale, pp,
                                                         num_experts=num_experts))
    out = fwd(x, params)
    out = jax.block_until_ready(out)

    expected = (b, c, math.ceil(h * scale), math.ceil(w * scale))
    assert out.shape == expected, (out.shape, expected)
    assert bool(jnp.all(jnp.isfinite(out)))
    print("KERNEL_OK")
</pallas_src>

<mosaic_0001>
module attributes {stable_mosaic.version = 11 : i64} {
  func.func private @main(%arg0: i32) attributes {dimension_semantics = [#tpu.dimension_semantics<core_parallel>], iteration_bounds = array<i64: 2>, tpu.core_type = #tpu.core_type<sc_scalar_subcore>, window_params = []} {
    return
  }
}

module attributes {stable_mosaic.version = 11 : i64} {
  func.func private @main(%arg0: i32) attributes {dimension_semantics = [#tpu.dimension_semantics<core_parallel>], iteration_bounds = array<i64: 2>, tpu.core_type = #tpu.core_type<sc_scalar_subcore>, window_params = []} {
    return
  }
}

module attributes {stable_mosaic.version = 11 : i64} {
  func.func @embed_head_kernel(%arg0: i32, %arg1: memref<8x128xbf16, #tpu.memory_space<vmem>>, %arg2: memref<8x16xbf16, #tpu.memory_space<vmem>>, %arg3: memref<128x128xbf16, #tpu.memory_space<vmem>>, %arg4: memref<16x128xbf16, #tpu.memory_space<vmem>>, %arg5: memref<1x128xf32, #tpu.memory_space<vmem>>, %arg6: memref<128x128xbf16, #tpu.memory_space<vmem>>, %arg7: memref<1x128xf32, #tpu.memory_space<vmem>>, %arg8: memref<128x8xbf16, #tpu.memory_space<vmem>>, %arg9: memref<1x8xf32, #tpu.memory_space<vmem>>, %arg10: memref<128x16xbf16, #tpu.memory_space<vmem>>, %arg11: memref<1x16xf32, #tpu.memory_space<vmem>>, %arg12: memref<8x8xf32, #tpu.memory_space<vmem>>, %arg13: memref<8x16xbf16, #tpu.memory_space<vmem>>) attributes {dimension_semantics = [#tpu.dimension_semantics<parallel>], iteration_bounds = array<i64: 4>, scalar_prefetch = 0 : i64, scratch_operands = 0 : i64, tpu.core_type = #tpu.core_type<tc>, window_params = [{transform_indices = @transform_0, window_bounds = array<i64: 8, 128>}, {transform_indices = @transform_1, window_bounds = array<i64: 8, 16>}, {pipeline_mode = #tpu.pipeline_mode<synchronous>, transform_indices = @transform_2, window_bounds = array<i64: 128, 128>}, {pipeline_mode = #tpu.pipeline_mode<synchronous>, transform_indices = @transform_3, window_bounds = array<i64: 16, 128>}, {pipeline_mode = #tpu.pipeline_mode<synchronous>, transform_indices = @transform_4, window_bounds = array<i64: 1, 128>}, {pipeline_mode = #tpu.pipeline_mode<synchronous>, transform_indices = @transform_5, window_bounds = array<i64: 128, 128>}, {pipeline_mode = #tpu.pipeline_mode<synchronous>, transform_indices = @transform_6, window_bounds = array<i64: 1, 128>}, {pipeline_mode = #tpu.pipeline_mode<synchronous>, transform_indices = @transform_7, window_bounds = array<i64: 128, 8>}, {pipeline_mode = #tpu.pipeline_mode<synchronous>, transform_indices = @transform_8, window_bounds = array<i64: 1, 8>}, {pipeline_mode = #tpu.pipeline_mode<synchronous>, transform_indices = @transform_9, window_bounds = array<i64: 128, 16>}, {pipeline_mode = #tpu.pipeline_mode<synchronous>, transform_indices = @transform_10, window_bounds = array<i64: 1, 16>}, {transform_indices = @transform_11, window_bounds = array<i64: 8, 8>}, {transform_indices = @transform_12, window_bounds = array<i64: 8, 16>}]} {
    %c0 = arith.constant 0 : index
    %c0_0 = arith.constant 0 : index
    %0 = vector.load %arg1[%c0, %c0_0] : memref<8x128xbf16, #tpu.memory_space<vmem>>, vector<8x128xbf16>
    %c0_1 = arith.constant 0 : index
    %c0_2 = arith.constant 0 : index
    %1 = vector.load %arg3[%c0_1, %c0_2] : memref<128x128xbf16, #tpu.memory_space<vmem>>, vector<128x128xbf16>
    %cst = arith.constant dense<0.000000e+00> : vector<8x128xf32>
    %2 = tpu.matmul %0, %1, %cst {dimension_numbers = #tpu.dot_dimension_numbers<[1], [0], [0], [1], [0, 0, 1, 1], [], []>} : vector<8x128xbf16>, vector<128x128xbf16>, vector<8x128xf32> -> vector<8x128xf32>
    %c0_3 = arith.constant 0 : index
    %c0_4 = arith.constant 0 : index
    %3 = vector.load %arg2[%c0_3, %c0_4] : memref<8x16xbf16, #tpu.memory_space<vmem>>, vector<8x16xbf16>
    %c0_5 = arith.constant 0 : index
    %c0_6 = arith.constant 0 : index
    %4 = vector.load %arg4[%c0_5, %c0_6] : memref<16x128xbf16, #tpu.memory_space<vmem>>, vector<16x128xbf16>
    %cst_7 = arith.constant dense<0.000000e+00> : vector<8x128xf32>
    %5 = tpu.matmul %3, %4, %cst_7 {dimension_numbers = #tpu.dot_dimension_numbers<[1], [0], [0], [1], [0, 0, 1, 1], [], []>} : vector<8x16xbf16>, vector<16x128xbf16>, vector<8x128xf32> -> vector<8x128xf32>
    %6 = arith.addf %2, %5 : vector<8x128xf32>
    %c0_8 = arith.constant 0 : index
    %c0_9 = arith.constant 0 : index
    %7 = vector.load %arg5[%c0_8, %c0_9] : memref<1x128xf32, #tpu.memory_space<vmem>>, vector<1x128xf32>
    %8 = vector.broadcast %7 : vector<1x128xf32> to vector<8x128xf32>
    %9 = arith.addf %6, %8 : vector<8x128xf32>
    %cst_10 = arith.constant 0.000000e+00 : f32
    %10 = vector.broadcast %cst_10 : f32 to vector<8x128xf32>
    %11 = arith.maximumf %9, %10 : vector<8x128xf32>
    %12 = arith.truncf %11 : vector<8x128xf32> to vector<8x128xbf16>
    %c0_11 = arith.constant 0 : index
    %c0_12 = arith.constant 0 : index
    %13 = vector.load %arg6[%c0_11, %c0_12] : memref<128x128xbf16, #tpu.memory_space<vmem>>, vector<128x128xbf16>
    %cst_13 = arith.constant dense<0.000000e+00> : vector<8x128xf32>
    %14 = tpu.matmul %12, %13, %cst_13 {dimension_numbers = #tpu.dot_dimension_numbers<[1], [0], [0], [1], [0, 0, 1, 1], [], []>} : vector<8x128xbf16>, vector<128x128xbf16>, vector<8x128xf32> -> vector<8x128xf32>
    %c0_14 = arith.constant 0 : index
    %c0_15 = arith.constant 0 : index
    %15 = vector.load %arg7[%c0_14, %c0_15] : memref<1x128xf32, #tpu.memory_space<vmem>>, vector<1x128xf32>
    %16 = vector.broadcast %15 : vector<1x128xf32> to vector<8x128xf32>
    %17 = arith.addf %14, %16 : vector<8x128xf32>
    %cst_16 = arith.constant 0.000000e+00 : f32
    %18 = vector.broadcast %cst_16 : f32 to vector<8x128xf32>
    %19 = arith.maximumf %17, %18 : vector<8x128xf32>
    %20 = arith.truncf %19 : vector<8x128xf32> to vector<8x128xbf16>
    %c0_17 = arith.constant 0 : index
    %c0_18 = arith.constant 0 : index
    %21 = vector.load %arg8[%c0_17, %c0_18] : memref<128x8xbf16, #tpu.memory_space<vmem>>, vector<128x8xbf16>
    %cst_19 = arith.constant dense<0.000000e+00> : vector<8x8xf32>
    %22 = tpu.matmul %20, %21, %cst_19 {dimension_numbers = #tpu.dot_dimension_numbers<[1], [0], [0], [1], [0, 0, 1, 1], [], []>} : vector<8x128xbf16>, vector<128x8xbf16>, vector<8x8xf32> -> vector<8x8xf32>
    %c0_20 = arith.constant 0 : index
    %c0_21 = arith.constant 0 : index
    %23 = vector.load %arg9[%c0_20, %c0_21] : memref<1x8xf32, #tpu.memory_space<vmem>>, vector<1x8xf32>
    %24 = vector.broadcast %23 : vector<1x8xf32> to vector<8x8xf32>
    %25 = arith.addf %22, %24 : vector<8x8xf32>
    %c0_22 = arith.constant 0 : index
    %c0_23 = arith.constant 0 : index
    %26 = vector.load %arg12[%c0_22, %c0_23] : memref<8x8xf32, #tpu.memory_space<vmem>>, vector<8x8xf32>
    tpu.vector_store %arg12[%c0_22, %c0_23], %25 {strides = array<i32>} : memref<8x8xf32, #tpu.memory_space<vmem>>, vector<8x8xf32>,
    %c0_24 = arith.constant 0 : index
    %c0_25 = arith.constant 0 : index
    %27 = vector.load %arg10[%c0_24, %c0_25] : memref<128x16xbf16, #tpu.memory_space<vmem>>, vector<128x16xbf16>
    %cst_26 = arith.constant dense<0.000000e+00> : vector<8x16xf32>
    %28 = tpu.matmul %20, %27, %cst_26 {dimension_numbers = #tpu.dot_dimension_numbers<[1], [0], [0], [1], [0, 0, 1, 1], [], []>} : vector<8x128xbf16>, vector<128x16xbf16>, vector<8x16xf32> -> vector<8x16xf32>
    %c0_27 = arith.constant 0 : index
    %c0_28 = arith.constant 0 : index
    %29 = vector.load %arg11[%c0_27, %c0_28] : memref<1x16xf32, #tpu.memory_space<vmem>>, vector<1x16xf32>
    %30 = vector.broadcast %29 : vector<1x16xf32> to vector<8x16xf32>
    %31 = arith.addf %28, %30 : vector<8x16xf32>
    %cst_29 = arith.constant 0.000000e+00 : f32
    %32 = vector.broadcast %cst_29 : f32 to vector<8x16xf32>
    %33 = arith.subf %32, %31 : vector<8x16xf32>
    %34 = math.exp %33 : vector<8x16xf32>
    %cst_30 = arith.constant 1.000000e+00 : f32
    %35 = vector.broadcast %cst_30 : f32 to vector<8x16xf32>
    %36 = arith.addf %35, %34 : vector<8x16xf32>
    %cst_31 = arith.constant 1.000000e+00 : f32
    %37 = vector.broadcast %cst_31 : f32 to vector<8x16xf32>
    %38 = arith.divf %37, %36 : vector<8x16xf32>
    %39 = arith.truncf %38 : vector<8x16xf32> to vector<8x16xbf16>
    %c0_32 = arith.constant 0 : index
    %c0_33 = arith.constant 0 : index
    %40 = vector.load %arg13[%c0_32, %c0_33] : memref<8x16xbf16, #tpu.memory_space<vmem>>, vector<8x16xbf16>
    tpu.vector_store %arg13[%c0_32, %c0_33], %39 {strides = array<i32>} : memref<8x16xbf16, #tpu.memory_space<vmem>>, vector<8x16xbf16>,
    return
  }
  func.func @transform_0(%arg0: i32) -> (i32, i32) {
    %c0_i32 = arith.constant 0 : i32
    %c0_i32_0 = arith.constant 0 : i32
    return %arg0, %c0_i32 : i32, i32
  }
  func.func @transform_1(%arg0: i32) -> (i32, i32) {
    %c0_i32 = arith.constant 0 : i32
    %c0_i32_0 = arith.constant 0 : i32
    return %arg0, %c0_i32 : i32, i32
  }
  func.func @transform_2(%arg0: i32) -> (i32, i32) {
    %c0_i32 = arith.constant 0 : i32
    %c0_i32_0 = arith.constant 0 : i32
    %c0_i32_1 = arith.constant 0 : i32
    return %c0_i32, %c0_i32_0 : i32, i32
  }
  func.func @transform_3(%arg0: i32) -> (i32, i32) {
    %c0_i32 = arith.constant 0 : i32
    %c0_i32_0 = arith.constant 0 : i32
    %c0_i32_1 = arith.constant 0 : i32
    return %c0_i32, %c0_i32_0 : i32, i32
  }
  func.func @transform_4(%arg0: i32) -> (i32, i32) {
    %c0_i32 = arith.constant 0 : i32
    %c0_i32_0 = arith.constant 0 : i32
    %c0_i32_1 = arith.constant 0 : i32
    return %c0_i32, %c0_i32_0 : i32, i32
  }
  func.func @transform_5(%arg0: i32) -> (i32, i32) {
    %c0_i32 = arith.constant 0 : i32
    %c0_i32_0 = arith.constant 0 : i32
    %c0_i32_1 = arith.constant 0 : i32
    return %c0_i32, %c0_i32_0 : i32, i32
  }
  func.func @transform_6(%arg0: i32) -> (i32, i32) {
    %c0_i32 = arith.constant 0 : i32
    %c0_i32_0 = arith.constant 0 : i32
    %c0_i32_1 = arith.constant 0 : i32
    return %c0_i32, %c0_i32_0 : i32, i32
  }
  func.func @transform_7(%arg0: i32) -> (i32, i32) {
    %c0_i32 = arith.constant 0 : i32
    %c0_i32_0 = arith.constant 0 : i32
    %c0_i32_1 = arith.constant 0 : i32
    return %c0_i32, %c0_i32_0 : i32, i32
  }
  func.func @transform_8(%arg0: i32) -> (i32, i32) {
    %c0_i32 = arith.constant 0 : i32
    %c0_i32_0 = arith.constant 0 : i32
    %c0_i32_1 = arith.constant 0 : i32
    return %c0_i32, %c0_i32_0 : i32, i32
  }
  func.func @transform_9(%arg0: i32) -> (i32, i32) {
    %c0_i32 = arith.constant 0 : i32
    %c0_i32_0 = arith.constant 0 : i32
    %c0_i32_1 = arith.constant 0 : i32
    return %c0_i32, %c0_i32_0 : i32, i32
  }
  func.func @transform_10(%arg0: i32) -> (i32, i32) {
    %c0_i32 = arith.constant 0 : i32
    %c0_i32_0 = arith.constant 0 : i32
    %c0_i32_1 = arith.constant 0 : i32
    return %c0_i32, %c0_i32_0 : i32, i32
  }
  func.func @transform_11(%arg0: i32) -> (i32, i32) {
    %c0_i32 = arith.constant 0 : i32
    %c0_i32_0 = arith.constant 0 : i32
    return %arg0, %c0_i32 : i32, i32
  }
  func.func @transform_12(%arg0: i32) -> (i32, i32) {
    %c0_i32 = arith.constant 0 : i32
    %c0_i32_0 = arith.constant 0 : i32
    return %arg0, %c0_i32 : i32, i32
  }
}

module attributes {stable_mosaic.version = 11 : i64} {
  func.func @expert_mix_kernel(%arg0: i32, %arg1: memref<8x128xbf16, #tpu.memory_space<vmem>>, %arg2: memref<8x16xbf16, #tpu.memory_space<vmem>>, %arg3: memref<16x64xbf16, #tpu.memory_space<vmem>>, %arg4: memref<128x64xbf16, #tpu.memory_space<vmem>>, %arg5: memref<64x64xbf16, #tpu.memory_space<vmem>>, %arg6: memref<64x128xbf16, #tpu.memory_space<vmem>>, %arg7: memref<8x128xf32, #tpu.memory_space<vmem>>) attributes {dimension_semantics = [#tpu.dimension_semantics<parallel>], iteration_bounds = array<i64: 4>, scalar_prefetch = 0 : i64, scratch_operands = 0 : i64, tpu.core_type = #tpu.core_type<tc>, window_params = [{transform_indices = @transform_0, window_bounds = array<i64: 8, 128>}, {transform_indices = @transform_1, window_bounds = array<i64: 8, 16>}, {pipeline_mode = #tpu.pipeline_mode<synchronous>, transform_indices = @transform_2, window_bounds = array<i64: 16, 64>}, {pipeline_mode = #tpu.pipeline_mode<synchronous>, transform_indices = @transform_3, window_bounds = array<i64: 128, 64>}, {pipeline_mode = #tpu.pipeline_mode<synchronous>, transform_indices = @transform_4, window_bounds = array<i64: 64, 64>}, {pipeline_mode = #tpu.pipeline_mode<synchronous>, transform_indices = @transform_5, window_bounds = array<i64: 64, 128>}, {transform_indices = @transform_6, window_bounds = array<i64: 8, 128>}]} {
    %c0 = arith.constant 0 : index
    %c0_0 = arith.constant 0 : index
    %0 = vector.load %arg2[%c0, %c0_0] : memref<8x16xbf16, #tpu.memory_space<vmem>>, vector<8x16xbf16>
    %c0_1 = arith.constant 0 : index
    %c0_2 = arith.constant 0 : index
    %1 = vector.load %arg3[%c0_1, %c0_2] : memref<16x64xbf16, #tpu.memory_space<vmem>>, vector<16x64xbf16>
    %cst = arith.constant dense<0.000000e+00> : vector<8x64xf32>
    %2 = tpu.matmul %0, %1, %cst {dimension_numbers = #tpu.dot_dimension_numbers<[1], [0], [0], [1], [0, 0, 1, 1], [], []>} : vector<8x16xbf16>, vector<16x64xbf16>, vector<8x64xf32> -> vector<8x64xf32>
    %c0_3 = arith.constant 0 : index
    %c0_4 = arith.constant 0 : index
    %3 = vector.load %arg1[%c0_3, %c0_4] : memref<8x128xbf16, #tpu.memory_space<vmem>>, vector<8x128xbf16>
    %c0_5 = arith.constant 0 : index
    %c0_6 = arith.constant 0 : index
    %4 = vector.load %arg4[%c0_5, %c0_6] : memref<128x64xbf16, #tpu.memory_space<vmem>>, vector<128x64xbf16>
    %cst_7 = arith.constant dense<0.000000e+00> : vector<8x64xf32>
    %5 = tpu.matmul %3, %4, %cst_7 {dimension_numbers = #tpu.dot_dimension_numbers<[1], [0], [0], [1], [0, 0, 1, 1], [], []>} : vector<8x128xbf16>, vector<128x64xbf16>, vector<8x64xf32> -> vector<8x64xf32>
    %6 = arith.mulf %5, %2 : vector<8x64xf32>
    %7 = arith.truncf %6 : vector<8x64xf32> to vector<8x64xbf16>
    %c0_8 = arith.constant 0 : index
    %c0_9 = arith.constant 0 : index
    %8 = vector.load %arg5[%c0_8, %c0_9] : memref<64x64xbf16, #tpu.memory_space<vmem>>, vector<64x64xbf16>
    %cst_10 = arith.constant dense<0.000000e+00> : vector<8x64xf32>
    %9 = tpu.matmul %7, %8, %cst_10 {dimension_numbers = #tpu.dot_dimension_numbers<[1], [0], [0], [1], [0, 0, 1, 1], [], []>} : vector<8x64xbf16>, vector<64x64xbf16>, vector<8x64xf32> -> vector<8x64xf32>
    %10 = arith.mulf %9, %2 : vector<8x64xf32>
    %11 = arith.truncf %10 : vector<8x64xf32> to vector<8x64xbf16>
    %c0_11 = arith.constant 0 : index
    %c0_12 = arith.constant 0 : index
    %12 = vector.load %arg6[%c0_11, %c0_12] : memref<64x128xbf16, #tpu.memory_space<vmem>>, vector<64x128xbf16>
    %cst_13 = arith.constant dense<0.000000e+00> : vector<8x128xf32>
    %13 = tpu.matmul %11, %12, %cst_13 {dimension_numbers = #tpu.dot_dimension_numbers<[1], [0], [0], [1], [0, 0, 1, 1], [], []>} : vector<8x64xbf16>, vector<64x128xbf16>, vector<8x128xf32> -> vector<8x128xf32>
    %c0_14 = arith.constant 0 : index
    %c0_15 = arith.constant 0 : index
    %14 = vector.load %arg1[%c0_14, %c0_15] : memref<8x128xbf16, #tpu.memory_space<vmem>>, vector<8x128xbf16>
    %15 = arith.extf %14 : vector<8x128xbf16> to vector<8x128xf32>
    %16 = arith.addf %13, %15 : vector<8x128xf32>
    %c0_16 = arith.constant 0 : index
    %c0_17 = arith.constant 0 : index
    %17 = vector.load %arg7[%c0_16, %c0_17] : memref<8x128xf32, #tpu.memory_space<vmem>>, vector<8x128xf32>
    tpu.vector_store %arg7[%c0_16, %c0_17], %16 {strides = array<i32>} : memref<8x128xf32, #tpu.memory_space<vmem>>, vector<8x128xf32>,
    return
  }
  func.func @transform_0(%arg0: i32) -> (i32, i32) {
    %c0_i32 = arith.constant 0 : i32
    %c0_i32_0 = arith.constant 0 : i32
    return %arg0, %c0_i32 : i32, i32
  }
  func.func @transform_1(%arg0: i32) -> (i32, i32) {
    %c0_i32 = arith.constant 0 : i32
    %c0_i32_0 = arith.constant 0 : i32
    return %arg0, %c0_i32 : i32, i32
  }
  func.func @transform_2(%arg0: i32) -> (i32, i32) {
    %c0_i32 = arith.constant 0 : i32
    %c0_i32_0 = arith.constant 0 : i32
    %c0_i32_1 = arith.constant 0 : i32
    return %c0_i32, %c0_i32_0 : i32, i32
  }
  func.func @transform_3(%arg0: i32) -> (i32, i32) {
    %c0_i32 = arith.constant 0 : i32
    %c0_i32_0 = arith.constant 0 : i32
    %c0_i32_1 = arith.constant 0 : i32
    return %c0_i32, %c0_i32_0 : i32, i32
  }
  func.func @transform_4(%arg0: i32) -> (i32, i32) {
    %c0_i32 = arith.constant 0 : i32
    %c0_i32_0 = arith.constant 0 : i32
    %c0_i32_1 = arith.constant 0 : i32
    return %c0_i32, %c0_i32_0 : i32, i32
  }
  func.func @transform_5(%arg0: i32) -> (i32, i32) {
    %c0_i32 = arith.constant 0 : i32
    %c0_i32_0 = arith.constant 0 : i32
    %c0_i32_1 = arith.constant 0 : i32
    return %c0_i32, %c0_i32_0 : i32, i32
  }
  func.func @transform_6(%arg0: i32) -> (i32, i32) {
    %c0_i32 = arith.constant 0 : i32
    %c0_i32_0 = arith.constant 0 : i32
    return %arg0, %c0_i32 : i32, i32
  }
}

</mosaic_0001>

<llo_original>
// kernel: tile.23
$region0: #{tile.23}
  #allocation0 [shape = 's32[1]{0}', space=sflag, size = 0x4, scoped, tag = 'scoped memory for tile.23']
  %s0 = inlined_call_operand.vmem [shape: f32[32], index: 0, kind: input, shape index: {}]
  %s1 = inlined_call_operand.vmem [shape: f32[4,32], index: 1, kind: output, shape index: {}]
  // Predicated region
  $region2: #{tile.23} parent=0 // pred_check
    _
  $region3: #{tile.23} parent=0 // pred_check_branch
    %3 = sbr.rel (0) target = $region5
  $region4: #{tile.23} parent=0 // pred_region
    _
  $region5: #{tile.23} parent=0 // pred_fallthru
    _
  %v4 = vld [vmem:[%s0] ss:$0 sm:$0xff]
  %5 = vst [vmem:[%s1] sm:$0xf] %v4

// kernel: tile.24
$region0: #{tile.24}
  %s0 = inlined_call_operand.vmem [shape: f32[4,32], index: 0, kind: input, shape index: {}]
  %s1 = inlined_call_operand.vmem [shape: f32[1,128], index: 1, kind: output, shape index: {}]
  $region1: #{tile.24} parent=0
    #allocation0 [shape = 'u8[4096]{0}', space=vmem, size = 0x1000, scoped, tag = 'scoped mem for output reshape']
    #allocation1 [shape = 'u8[4096]{0}', space=vmem, size = 0x1000, scoped, tag = 'scoped mem for input reshape']
    %s3 = sshllo.u32 0, 4
    %v4 = vld [vmem:[%s0] sm:%s3]
    %5 = vst [vmem:[#allocation1] sm:%s3] %v4
    %v6 = vld [vmem:[#allocation1] sm:$0x1]
    %vm7 = vcmask 261120
    %8 = vst.msk [vmem:[#allocation0] sm:$0x1] %vm7, %v6
    %s9 = scalar_lea.vmem [#allocation1], 3
    %v10 = vld [vmem:[%s9] sm:$0x1]
    %11 = vrot.lane.b32.xlu0 %v10, 96
    %v12 = vpop.permute.xlu0 %11
    %vm13 = vcmask 1048320
    %14 = vst.msk [vmem:[#allocation0] sm:$0x1] %vm13, %v12
    %s15 = scalar_lea.vmem [#allocation1], 2
    %v16 = vld [vmem:[%s15] sm:$0x1]
    %17 = vrot.lane.b32.xlu0 %v16, 64
    %v18 = vpop.permute.xlu0 %17
    %vm19 = vcmask 785920
    %20 = vst.msk [vmem:[#allocation0] sm:$0x1] %vm19, %v18
    %s21 = scalar_lea.vmem [#allocation1], 1
    %v22 = vld [vmem:[%s21] sm:$0x1]
    %23 = vrot.lane.b32.xlu0 %v22, 32
    %v24 = vpop.permute.xlu0 %23
    %vm25 = vcmask 523520
    %26 = vst.msk [vmem:[#allocation0] sm:$0x1] %vm25, %v24
    %s28 = sshllo.u32 0, 1
    %v30 = vld [vmem:[#allocation0] sm:%s28]
    %s31 = sshllo.u32 0, 1
    %32 = vst [vmem:[%s1] sm:%s31] %v30

// kernel: tile.33
$region0: #{tile.33}
  #allocation0 [shape = 's32[1]{0}', space=sflag, size = 0x4, scoped, tag = 'scoped memory for tile.33']
  %s0 = inlined_call_operand.vmem [shape: f32[2], index: 0, kind: input, shape index: {}]
  %s1 = inlined_call_operand.vmem [shape: f32[4,2], index: 1, kind: output, shape index: {}]
  // Predicated region
  $region2: #{tile.33} parent=0 // pred_check
    _
  $region3: #{tile.33} parent=0 // pred_check_branch
    %3 = sbr.rel (0) target = $region5
  $region4: #{tile.33} parent=0 // pred_region
    _
  $region5: #{tile.33} parent=0 // pred_fallthru
    _
  %v4 = vld [vmem:[%s0] ss:$0 sm:$0xff]
  %5 = vst [vmem:[%s1] sm:$0xf] %v4

// kernel: tile.34
$region0: #{tile.34}
  %s0 = inlined_call_operand.vmem [shape: f32[4,2], index: 0, kind: input, shape index: {}]
  %s1 = inlined_call_operand.vmem [shape: f32[1,8], index: 1, kind: output, shape index: {}]
  $region1: #{tile.34} parent=0
    #allocation0 [shape = 'u8[4096]{0}', space=vmem, size = 0x1000, scoped, tag = 'scoped mem for output reshape']
    #allocation1 [shape = 'u8[4096]{0}', space=vmem, size = 0x1000, scoped, tag = 'scoped mem for input reshape']
    %s3 = sshllo.u32 0, 4
    %v4 = vld [vmem:[%s0] sm:%s3]
    %5 = vst [vmem:[#allocation1] sm:%s3] %v4
    %v6 = vld [vmem:[#allocation1] sm:$0x1]
    %vm7 = vcmask 15360
    %8 = vst.msk [vmem:[#allocation0] sm:$0x1] %vm7, %v6
    %s9 = scalar_lea.vmem [#allocation1], 3
    %v10 = vld [vmem:[%s9] sm:$0x1]
    %11 = vrot.lane.b32.xlu0 %v10, 6
    %v12 = vpop.permute.xlu0 %11
    %vm13 = vcmask 64560
    %14 = vst.msk [vmem:[#allocation0] sm:$0x1] %vm13, %v12
    %s15 = scalar_lea.vmem [#allocation1], 2
    %v16 = vld [vmem:[%s15] sm:$0x1]
    %17 = vrot.lane.b32.xlu0 %v16, 4
    %v18 = vpop.permute.xlu0 %17
    %vm19 = vcmask 48160
    %20 = vst.msk [vmem:[#allocation0] sm:$0x1] %vm19, %v18
    %s21 = scalar_lea.vmem [#allocation1], 1
    %v22 = vld [vmem:[%s21] sm:$0x1]
    %23 = vrot.lane.b32.xlu0 %v22, 2
    %v24 = vpop.permute.xlu0 %23
    %vm25 = vcmask 31760
    %26 = vst.msk [vmem:[#allocation0] sm:$0x1] %vm25, %v24
    %s28 = sshllo.u32 0, 1
    %v30 = vld [vmem:[#allocation0] sm:%s28]
    %s31 = sshllo.u32 0, 1
    %32 = vst [vmem:[%s1] sm:%s31] %v30

// kernel: tile.38
$region0: #{tile.38}
  #allocation0 [shape = 's32[1]{0}', space=sflag, size = 0x4, scoped, tag = 'scoped memory for tile.38']
  %s0 = inlined_call_operand.vmem [shape: f32[4], index: 0, kind: input, shape index: {}]
  %s1 = inlined_call_operand.vmem [shape: f32[4,4], index: 1, kind: output, shape index: {}]
  // Predicated region
  $region2: #{tile.38} parent=0 // pred_check
    _
  $region3: #{tile.38} parent=0 // pred_check_branch
    %3 = sbr.rel (0) target = $region5
  $region4: #{tile.38} parent=0 // pred_region
    _
  $region5: #{tile.38} parent=0 // pred_fallthru
    _
  %v4 = vld [vmem:[%s0] ss:$0 sm:$0xff]
  %5 = vst [vmem:[%s1] sm:$0xf] %v4

// kernel: tile.39
$region0: #{tile.39}
  %s0 = inlined_call_operand.vmem [shape: f32[4,4], index: 0, kind: input, shape index: {}]
  %s1 = inlined_call_operand.vmem [shape: f32[1,16], index: 1, kind: output, shape index: {}]
  $region1: #{tile.39} parent=0
    #allocation0 [shape = 'u8[4096]{0}', space=vmem, size = 0x1000, scoped, tag = 'scoped mem for output reshape']
    #allocation1 [shape = 'u8[4096]{0}', space=vmem, size = 0x1000, scoped, tag = 'scoped mem for input reshape']
    %s3 = sshllo.u32 0, 4
    %v4 = vld [vmem:[%s0] sm:%s3]
    %5 = vst [vmem:[#allocation1] sm:%s3] %v4
    %v6 = vld [vmem:[#allocation1] sm:$0x1]
    %vm7 = vcmask 31744
    %8 = vst.msk [vmem:[#allocation0] sm:$0x1] %vm7, %v6
    %s9 = scalar_lea.vmem [#allocation1], 3
    %v10 = vld [vmem:[%s9] sm:$0x1]
    %11 = vrot.lane.b32.xlu0 %v10, 12
    %v12 = vpop.permute.xlu0 %11
    %vm13 = vcmask 130144
    %14 = vst.msk [vmem:[#allocation0] sm:$0x1] %vm13, %v12
    %s15 = scalar_lea.vmem [#allocation1], 2
    %v16 = vld [vmem:[%s15] sm:$0x1]
    %17 = vrot.lane.b32.xlu0 %v16, 8
    %v18 = vpop.permute.xlu0 %17
    %vm19 = vcmask 97344
    %20 = vst.msk [vmem:[#allocation0] sm:$0x1] %vm19, %v18
    %s21 = scalar_lea.vmem [#allocation1], 1
    %v22 = vld [vmem:[%s21] sm:$0x1]
    %23 = vrot.lane.b32.xlu0 %v22, 4
    %v24 = vpop.permute.xlu0 %23
    %vm25 = vcmask 64544
    %26 = vst.msk [vmem:[#allocation0] sm:$0x1] %vm25, %v24
    %s28 = sshllo.u32 0, 1
    %v30 = vld [vmem:[#allocation0] sm:%s28]
    %s31 = sshllo.u32 0, 1
    %32 = vst [vmem:[%s1] sm:%s31] %v30

// kernel: _lambda_.2
$region0: #{_lambda_.2}
  #allocation0 [shape = 'u32[]', space=smem, size = 0x4, offset = 0x4, fixed_abs, tag = 'smem constant byte address 0x4 - core index']
  #allocation1 [shape = 'u32[144,128]{1,0:T(1,128)}', space=vmem, size = 0x12000, scoped, tag = 'internal scratch']
  %s0 = inlined_call_operand.vmem [shape: bf16[32,128], index: 0, kind: input, shape index: {}]
  %s1 = inlined_call_operand.vmem [shape: bf16[32,16], index: 1, kind: input, shape index: {}]
  %s2 = inlined_call_operand.vmem [shape: bf16[128,128], index: 2, kind: input, shape index: {}]
  %s3 = inlined_call_operand.vmem [shape: bf16[16,128], index: 3, kind: input, shape index: {}]
  %s4 = inlined_call_operand.vmem [shape: f32[1,128], index: 4, kind: input, shape index: {}]
  %s5 = inlined_call_operand.vmem [shape: bf16[128,128], index: 5, kind: input, shape index: {}]
  %s6 = inlined_call_operand.vmem [shape: f32[1,128], index: 6, kind: input, shape index: {}]
  %s7 = inlined_call_operand.vmem [shape: bf16[128,8], index: 7, kind: input, shape index: {}]
  %s8 = inlined_call_operand.vmem [shape: f32[1,8], index: 8, kind: input, shape index: {}]
  %s9 = inlined_call_operand.vmem [shape: bf16[128,16], index: 9, kind: input, shape index: {}]
  %s10 = inlined_call_operand.vmem [shape: f32[1,16], index: 10, kind: input, shape index: {}]
  %s11 = inlined_call_operand.vmem [shape: f32[32,8], index: 11, kind: output, shape index: {0}]
  %s12 = inlined_call_operand.hbm [shape: bf16[32,16], index: 12, kind: output, shape index: {1}]
  %13 = xla_tuple %s11, %s12
  %s14 = sld [smem:[#allocation0]]
  $region85: #{_lambda_.2} parent=0
    _
  %s16 = ssub.s32 1, %s14
  %s17 = scalar_select 0, %s16, %s14
  $region1: #{_lambda_.2} parent=0
    #allocation2 [shape = 'u8[4096]{0}', space=vmem, size = 0x1000, scoped, tag = 'output window, operand 1']
    #allocation3 [shape = 's32[2]{0}', space=sflag, size = 0x8, scoped, tag = 'scoped memory for _lambda_.2']
    %18 = vsyncpa [#allocation3], 0
    %s19 = scalar_lea.sflag [#allocation3], 1
    %20 = vsyncpa %s19, 0
    loop: start=0, step=1, limit=6
    $region2: #{_lambda_.2} parent=1 // loop_pre_header
      _
    $region3: #{_lambda_.2} parent=1 // loop_header
      %s22 = sphi 0, %s26
      %p23 = scmp.ge.s32.totalorder %s22, 6
      %s32 = sphi 0, %s34
      %s35 = sphi 0, %s32
      %s36 = sphi 0, %s35
      %s52 = sphi 0, %s36
      %s58 = sphi 0, %s60
      %s61 = sphi 0, %s58
      %s62 = sphi 0, %s61
      %s78 = sphi 0, %s62
      %s82 = sphi 0, %s82
      %s84 = sphi 0, %s82
      %s85 = sphi 0, %s84
      %s99 = sphi 0, %s85
      %s103 = sphi 0, %s103
      %s105 = sphi 0, %s103
      %s106 = sphi 0, %s105
      %s120 = sphi 0, %s106
      %s124 = sphi 0, %s124
      %s126 = sphi 0, %s124
      %s127 = sphi 0, %s126
      %s141 = sphi 0, %s127
      %s145 = sphi 0, %s145
      %s147 = sphi 0, %s145
      %s148 = sphi 0, %s147
      %s162 = sphi 0, %s148
      %s166 = sphi 0, %s166
      %s168 = sphi 0, %s166
      %s169 = sphi 0, %s168
      %s183 = sphi 0, %s169
      %s187 = sphi 0, %s187
      %s189 = sphi 0, %s187
      %s190 = sphi 0, %s189
      %s204 = sphi 0, %s190
      %s208 = sphi 0, %s208
      %s210 = sphi 0, %s208
      %s211 = sphi 0, %s210
      %s225 = sphi 0, %s211
      %s229 = sphi 0, %s229
      %s231 = sphi 0, %s229
      %s232 = sphi 0, %s231
      %s246 = sphi 0, %s232
      %s250 = sphi 0, %s250
      %s252 = sphi 0, %s250
      %s253 = sphi 0, %s252
      %s267 = sphi 0, %s253
      %s273 = sphi 0, %s275
      %s276 = sphi 0, %s273
      %s277 = sphi 0, %s276
      %s293 = sphi 0, %s277
      %s299 = sphi 0, %s301
      %s302 = sphi 0, %s299
      %s303 = sphi 0, %s302
      %s319 = sphi 0, %s303
    $region4: #{_lambda_.2} parent=1 // loop_header_branch
      %25 = sbr.rel (%p23) target = $region8
    $region5: #{_lambda_.2} parent=1 // loop_body
      %s27 = ssub.s32 %s22, 1
      %s28 = ssub.s32 %s22, 2
      %s29 = sadd.s32 %s22, 1
      %s30 = ssub.s32 %s22, %s29
      %p31 = scmp.eq.s32.totalorder %s30, 0
      %s33 = sadd.s32 %s32, 1
      %s34 = scalar_select %p31, %s32, %s33
      %p37 = pneg %p31
      %p38 = scmp.eq.s32.totalorder %s22, 3
      %p39 = por %p37, %p38
      %p40 = scmp.ne.s32.totalorder %s32, %s35
      %p41 = scmp.eq.s32.totalorder %s22, 0
      %p42 = por %p40, %p41
      %p43 = scmp.ne.s32.totalorder %s32, %s35
      %p44 = scmp.eq.s32.totalorder %s27, 3
      %p45 = por %p43, %p44
      %p46 = scmp.ne.s32.totalorder %s35, %s36
      %p47 = scmp.eq.s32.totalorder %s27, 0
      %p48 = por %p46, %p47
      %p49 = scmp.ne.s32.totalorder %s35, %s36
      %p50 = scmp.eq.s32.totalorder %s28, 3
      %p51 = por %p49, %p50
      %p53 = scmp.ne.s32.totalorder %s36, %s52
      %p54 = scmp.eq.s32.totalorder %s28, 0
      %p55 = por %p53, %p54
      %s56 = ssub.s32 %s22, %s29
      %p57 = scmp.eq.s32.totalorder %s56, 0
      %s59 = sadd.s32 %s58, 1
      %s60 = scalar_select %p57, %s58, %s59
      %p63 = pneg %p57
      %p64 = scmp.eq.s32.totalorder %s22, 3
      %p65 = por %p63, %p64
      %p66 = scmp.ne.s32.totalorder %s58, %s61
      %p67 = scmp.eq.s32.totalorder %s22, 0
      %p68 = por %p66, %p67
      %p69 = scmp.ne.s32.totalorder %s58, %s61
      %p70 = scmp.eq.s32.totalorder %s27, 3
      %p71 = por %p69, %p70
      %p72 = scmp.ne.s32.totalorder %s61, %s62
      %p73 = scmp.eq.s32.totalorder %s27, 0
      %p74 = por %p72, %p73
      %p75 = scmp.ne.s32.totalorder %s61, %s62
      %p76 = scmp.eq.s32.totalorder %s28, 3
      %p77 = por %p75, %p76
      %p79 = scmp.ne.s32.totalorder %s62, %s78
      %p80 = scmp.eq.s32.totalorder %s28, 0
      %p81 = por %p79, %p80
      %s83 = sadd.s32 %s82, 1
      %p86 = scmp.eq.s32.totalorder %s22, 3
      %p87 = scmp.ne.s32.totalorder %s82, %s84
      %p88 = scmp.eq.s32.totalorder %s22, 0
      %p89 = por %p87, %p88
      %p90 = scmp.ne.s32.totalorder %s82, %s84
      %p91 = scmp.eq.s32.totalorder %s27, 3
      %p92 = por %p90, %p91
      %p93 = scmp.ne.s32.totalorder %s84, %s85
      %p94 = scmp.eq.s32.totalorder %s27, 0
      %p95 = por %p93, %p94
      %p96 = scmp.ne.s32.totalorder %s84, %s85
      %p97 = scmp.eq.s32.totalorder %s28, 3
      %p98 = por %p96, %p97
      %p100 = scmp.ne.s32.totalorder %s85, %s99
      %p101 = scmp.eq.s32.totalorder %s28, 0
      %p102 = por %p100, %p101
      %s104 = sadd.s32 %s103, 1
      %p107 = scmp.eq.s32.totalorder %s22, 3
      %p108 = scmp.ne.s32.totalorder %s103, %s105
      %p109 = scmp.eq.s32.totalorder %s22, 0
      %p110 = por %p108, %p109
      %p111 = scmp.ne.s32.totalorder %s103, %s105
      %p112 = scmp.eq.s32.totalorder %s27, 3
      %p113 = por %p111, %p112
      %p114 = scmp.ne.s32.totalorder %s105, %s106
      %p115 = scmp.eq.s32.totalorder %s27, 0
      %p116 = por %p114, %p115
      %p117 = scmp.ne.s32.totalorder %s105, %s106
      %p118 = scmp.eq.s32.totalorder %s28, 3
      %p119 = por %p117, %p118
      %p121 = scmp.ne.s32.totalorder %s106, %s120
      %p122 = scmp.eq.s32.totalorder %s28, 0
      %p123 = por %p121, %p122
      %s125 = sadd.s32 %s124, 1
      %p128 = scmp.eq.s32.totalorder %s22, 3
      %p129 = scmp.ne.s32.totalorder %s124, %s126
      %p130 = scmp.eq.s32.totalorder %s22, 0
      %p131 = por %p129, %p130
      %p132 = scmp.ne.s32.totalorder %s124, %s126
      %p133 = scmp.eq.s32.totalorder %s27, 3
      %p134 = por %p132, %p133
      %p135 = scmp.ne.s32.totalorder %s126, %s127
      %p136 = scmp.eq.s32.totalorder %s27, 0
      %p137 = por %p135, %p136
      %p138 = scmp.ne.s32.totalorder %s126, %s127
      %p139 = scmp.eq.s32.totalorder %s28, 3
      %p140 = por %p138, %p139
      %p142 = scmp.ne.s32.totalorder %s127, %s141
      %p143 = scmp.eq.s32.totalorder %s28, 0
      %p144 = por %p142, %p143
      %s146 = sadd.s32 %s145, 1
      %p149 = scmp.eq.s32.totalorder %s22, 3
      %p150 = scmp.ne.s32.totalorder %s145, %s147
      %p151 = scmp.eq.s32.totalorder %s22, 0
      %p152 = por %p150, %p151
      %p153 = scmp.ne.s32.totalorder %s145, %s147
      %p154 = scmp.eq.s32.totalorder %s27, 3
      %p155 = por %p153, %p154
      %p156 = scmp.ne.s32.totalorder %s147, %s148
      %p157 = scmp.eq.s32.totalorder %s27, 0
      %p158 = por %p156, %p157
      %p159 = scmp.ne.s32.totalorder %s147, %s148
      %p160 = scmp.eq.s32.totalorder %s28, 3
      %p161 = por %p159, %p160
      %p163 = scmp.ne.s32.totalorder %s148, %s162
      %p164 = scmp.eq.s32.totalorder %s28, 0
      %p165 = por %p163, %p164
      %s167 = sadd.s32 %s166, 1
      %p170 = scmp.eq.s32.totalorder %s22, 3
      %p171 = scmp.ne.s32.totalorder %s166, %s168
      %p172 = scmp.eq.s32.totalorder %s22, 0
      %p173 = por %p171, %p172
      %p174 = scmp.ne.s32.totalorder %s166, %s168
      %p175 = scmp.eq.s32.totalorder %s27, 3
      %p176 = por %p174, %p175
      %p177 = scmp.ne.s32.totalorder %s168, %s169
      %p178 = scmp.eq.s32.totalorder %s27, 0
      %p179 = por %p177, %p178
      %p180 = scmp.ne.s32.totalorder %s168, %s169
      %p181 = scmp.eq.s32.totalorder %s28, 3
      %p182 = por %p180, %p181
      %p184 = scmp.ne.s32.totalorder %s169, %s183
      %p185 = scmp.eq.s32.totalorder %s28, 0
      %p186 = por %p184, %p185
      %s188 = sadd.s32 %s187, 1
      %p191 = scmp.eq.s32.totalorder %s22, 3
      %p192 = scmp.ne.s32.totalorder %s187, %s189
      %p193 = scmp.eq.s32.totalorder %s22, 0
      %p194 = por %p192, %p193
      %p195 = scmp.ne.s32.totalorder %s187, %s189
      %p196 = scmp.eq.s32.totalorder %s27, 3
      %p197 = por %p195, %p196
      %p198 = scmp.ne.s32.totalorder %s189, %s190
      %p199 = scmp.eq.s32.totalorder %s27, 0
      %p200 = por %p198, %p199
      %p201 = scmp.ne.s32.totalorder %s189, %s190
      %p202 = scmp.eq.s32.totalorder %s28, 3
      %p203 = por %p201, %p202
      %p205 = scmp.ne.s32.totalorder %s190, %s204
      %p206 = scmp.eq.s32.totalorder %s28, 0
      %p207 = por %p205, %p206
      %s209 = sadd.s32 %s208, 1
      %p212 = scmp.eq.s32.totalorder %s22, 3
      %p213 = scmp.ne.s32.totalorder %s208, %s210
      %p214 = scmp.eq.s32.totalorder %s22, 0
      %p215 = por %p213, %p214
      %p216 = scmp.ne.s32.totalorder %s208, %s210
      %p217 = scmp.eq.s32.totalorder %s27, 3
      %p218 = por %p216, %p217
      %p219 = scmp.ne.s32.totalorder %s210, %s211
      %p220 = scmp.eq.s32.totalorder %s27, 0
      %p221 = por %p219, %p220
      %p222 = scmp.ne.s32.totalorder %s210, %s211
      %p223 = scmp.eq.s32.totalorder %s28, 3
      %p224 = por %p222, %p223
      %p226 = scmp.ne.s32.totalorder %s211, %s225
      %p227 = scmp.eq.s32.totalorder %s28, 0
      %p228 = por %p226, %p227
      %s230 = sadd.s32 %s229, 1
      %p233 = scmp.eq.s32.totalorder %s22, 3
      %p234 = scmp.ne.s32.totalorder %s229, %s231
      %p235 = scmp.eq.s32.totalorder %s22, 0
      %p236 = por %p234, %p235
      %p237 = scmp.ne.s32.totalorder %s229, %s231
      %p238 = scmp.eq.s32.totalorder %s27, 3
      %p239 = por %p237, %p238
      %p240 = scmp.ne.s32.totalorder %s231, %s232
      %p241 = scmp.eq.s32.totalorder %s27, 0
      %p242 = por %p240, %p241
      %p243 = scmp.ne.s32.totalorder %s231, %s232
      %p244 = scmp.eq.s32.totalorder %s28, 3
      %p245 = por %p243, %p244
      %p247 = scmp.ne.s32.totalorder %s232, %s246
      %p248 = scmp.eq.s32.totalorder %s28, 0
      %p249 = por %p247, %p248
      %s251 = sadd.s32 %s250, 1
      %p254 = scmp.eq.s32.totalorder %s22, 3
      %p255 = scmp.ne.s32.totalorder %s250, %s252
      %p256 = scmp.eq.s32.totalorder %s22, 0
      %p257 = por %p255, %p256
      %p258 = scmp.ne.s32.totalorder %s250, %s252
      %p259 = scmp.eq.s32.totalorder %s27, 3
      %p260 = por %p258, %p259
      %p261 = scmp.ne.s32.totalorder %s252, %s253
      %p262 = scmp.eq.s32.totalorder %s27, 0
      %p263 = por %p261, %p262
      %p264 = scmp.ne.s32.totalorder %s252, %s253
      %p265 = scmp.eq.s32.totalorder %s28, 3
      %p266 = por %p264, %p265
      %p268 = scmp.ne.s32.totalorder %s253, %s267
      %p269 = scmp.eq.s32.totalorder %s28, 0
      %p270 = por %p268, %p269
      %s271 = ssub.s32 %s22, %s29
      %p272 = scmp.eq.s32.totalorder %s271, 0
      %s274 = sadd.s32 %s273, 1
      %s275 = scalar_select %p272, %s273, %s274
      %p278 = pneg %p272
      %p279 = scmp.eq.s32.totalorder %s22, 3
      %p280 = por %p278, %p279
      %p281 = scmp.ne.s32.totalorder %s273, %s276
      %p282 = scmp.eq.s32.totalorder %s22, 0
      %p283 = por %p281, %p282
      %p284 = scmp.ne.s32.totalorder %s273, %s276
      %p285 = scmp.eq.s32.totalorder %s27, 3
      %p286 = por %p284, %p285
      %p287 = scmp.ne.s32.totalorder %s276, %s277
      %p288 = scmp.eq.s32.totalorder %s27, 0
      %p289 = por %p287, %p288
      %p290 = scmp.ne.s32.totalorder %s276, %s277
      %p291 = scmp.eq.s32.totalorder %s28, 3
      %p292 = por %p290, %p291
      %p294 = scmp.ne.s32.totalorder %s277, %s293
      %p295 = scmp.eq.s32.totalorder %s28, 0
      %p296 = por %p294, %p295
      %s297 = ssub.s32 %s22, %s29
      %p298 = scmp.eq.s32.totalorder %s297, 0
      %s300 = sadd.s32 %s299, 1
      %s301 = scalar_select %p298, %s299, %s300
      %p304 = pneg %p298
      %p305 = scmp.eq.s32.totalorder %s22, 3
      %p306 = por %p304, %p305
      %p307 = scmp.ne.s32.totalorder %s299, %s302
      %p308 = scmp.eq.s32.totalorder %s22, 0
      %p309 = por %p307, %p308
      %p310 = scmp.ne.s32.totalorder %s299, %s302
      %p311 = scmp.eq.s32.totalorder %s27, 3
      %p312 = por %p310, %p311
      %p313 = scmp.ne.s32.totalorder %s302, %s303
      %p314 = scmp.eq.s32.totalorder %s27, 0
      %p315 = por %p313, %p314
      %p316 = scmp.ne.s32.totalorder %s302, %s303
      %p317 = scmp.eq.s32.totalorder %s28, 3
      %p318 = por %p316, %p317
      %p320 = scmp.ne.s32.totalorder %s303, %s319
      %p321 = scmp.eq.s32.totalorder %s28, 0
      %p322 = por %p320, %p321
      %p323 = scmp.le.s32.totalorder 1, %s22
      %p324 = scmp.lt.s32.totalorder %s22, 5
      %p325 = pnand %p323, %p324
      %p326 = pneg %p325
      // Predicated region
      $region9: #{_lambda_.2} parent=5 // pred_check
        _
      $region10: #{_lambda_.2} parent=5 // pred_check_branch
        %328 = sbr.rel (%p325) target = $region12
      $region11: #{_lambda_.2} parent=5 // pred_region
        %s329 = ssub.s32 %s22, 1
        // Predicated region
        $region13: #{_lambda_.2} parent=11 // pred_check
          %p330 = pneg %p95
        $region14: #{_lambda_.2} parent=11 // pred_check_branch
          %332 = sbr.rel (%p330) target = $region16
        $region15: #{_lambda_.2} parent=11 // pred_region
          _
        $region16: #{_lambda_.2} parent=11 // pred_fallthru
          _
        // Predicated region
        $region17: #{_lambda_.2} parent=11 // pred_check
          %p333 = pneg %p116
        $region18: #{_lambda_.2} parent=11 // pred_check_branch
          %335 = sbr.rel (%p333) target = $region20
        $region19: #{_lambda_.2} parent=11 // pred_region
          _
        $region20: #{_lambda_.2} parent=11 // pred_fallthru
          _
        // Predicated region
        $region21: #{_lambda_.2} parent=11 // pred_check
          %p336 = pneg %p137
        $region22: #{_lambda_.2} parent=11 // pred_check_branch
          %338 = sbr.rel (%p336) target = $region24
        $region23: #{_lambda_.2} parent=11 // pred_region
          _
        $region24: #{_lambda_.2} parent=11 // pred_fallthru
          _
        // Predicated region
        $region25: #{_lambda_.2} parent=11 // pred_check
          %p339 = pneg %p158
        $region26: #{_lambda_.2} parent=11 // pred_check_branch
          %341 = sbr.rel (%p339) target = $region28
        $region27: #{_lambda_.2} parent=11 // pred_region
          _
        $region28: #{_lambda_.2} parent=11 // pred_fallthru
          _
        // Predicated region
        $region29: #{_lambda_.2} parent=11 // pred_check
          %p342 = pneg %p179
        $region30: #{_lambda_.2} parent=11 // pred_check_branch
          %344 = sbr.rel (%p342) target = $region32
        $region31: #{_lambda_.2} parent=11 // pred_region
          _
        $region32: #{_lambda_.2} parent=11 // pred_fallthru
          _
        // Predicated region
        $region33: #{_lambda_.2} parent=11 // pred_check
          %p345 = pneg %p200
        $region34: #{_lambda_.2} parent=11 // pred_check_branch
          %347 = sbr.rel (%p345) target = $region36
        $region35: #{_lambda_.2} parent=11 // pred_region
          _
        $region36: #{_lambda_.2} parent=11 // pred_fallthru
          _
        // Predicated region
        $region37: #{_lambda_.2} parent=11 // pred_check
          %p348 = pneg %p221
        $region38: #{_lambda_.2} parent=11 // pred_check_branch
          %350 = sbr.rel (%p348) target = $region40
        $region39: #{_lambda_.2} parent=11 // pred_region
          _
        $region40: #{_lambda_.2} parent=11 // pred_fallthru
          _
        // Predicated region
        $region41: #{_lambda_.2} parent=11 // pred_check
          %p351 = pneg %p242
        $region42: #{_lambda_.2} parent=11 // pred_check_branch
          %353 = sbr.rel (%p351) target = $region44
        $region43: #{_lambda_.2} parent=11 // pred_region
          _
        $region44: #{_lambda_.2} parent=11 // pred_fallthru
          _
        // Predicated region
        $region45: #{_lambda_.2} parent=11 // pred_check
          %p354 = pneg %p263
        $region46: #{_lambda_.2} parent=11 // pred_check_branch
          %356 = sbr.rel (%p354) target = $region48
        $region47: #{_lambda_.2} parent=11 // pred_region
          _
        $region48: #{_lambda_.2} parent=11 // pred_fallthru
          _
      $region12: #{_lambda_.2} parent=5 // pred_fallthru
        _
      %p357 = scmp.lt.s32.totalorder %s22, 4
      // Predicated region
      $region49: #{_lambda_.2} parent=5 // pred_check
        %p358 = pneg %p357
      $region50: #{_lambda_.2} parent=5 // pred_check_branch
        %360 = sbr.rel (%p358) target = $region52
      $region51: #{_lambda_.2} parent=5 // pred_region
        // Predicated region
        $region53: #{_lambda_.2} parent=51 // pred_check
          %p361 = pneg %p42
        $region54: #{_lambda_.2} parent=51 // pred_check_branch
          %363 = sbr.rel (%p361) target = $region56
        $region55: #{_lambda_.2} parent=51 // pred_region
          %p364 = scmp.lt.s32.totalorder %s22, 3
          %s365 = scalar_select %p364, %s22, 3
          %s366 = smul.addr %s365, 4
          %s367 = scalar_lea.vmem %s0, %s366
        $region56: #{_lambda_.2} parent=51 // pred_fallthru
          _
        // Predicated region
        $region57: #{_lambda_.2} parent=51 // pred_check
          %p368 = pneg %p68
        $region58: #{_lambda_.2} parent=51 // pred_check_branch
          %370 = sbr.rel (%p368) target = $region60
        $region59: #{_lambda_.2} parent=51 // pred_region
          %p371 = scmp.lt.s32.totalorder %s22, 3
          %s372 = scalar_select %p371, %s22, 3
          %s373 = smul.addr %s372, 4
          %s374 = scalar_lea.vmem %s1, %s373
        $region60: #{_lambda_.2} parent=51 // pred_fallthru
          _
      $region52: #{_lambda_.2} parent=5 // pred_fallthru
        _
      %p375 = scmp.le.s32.totalorder 1, %s22
      %p376 = scmp.lt.s32.totalorder %s22, 5
      %p377 = pnand %p375, %p376
      %p378 = pneg %p377
      // Predicated region
      $region61: #{_lambda_.2} parent=5 // pred_check
        _
      $region62: #{_lambda_.2} parent=5 // pred_check_branch
        %380 = sbr.rel (%p377) target = $region64
      $region63: #{_lambda_.2} parent=5 // pred_region
        %s381 = ssub.s32 %s22, 1
        %p382 = scmp.lt.s32.totalorder %s27, 3
        %s383 = scalar_select %p382, %s27, 3
        %s384 = smul.addr %s383, 4
        %s385 = scalar_lea.vmem %s0, %s384
        %p386 = pneg %p48
        %p387 = pneg %p45
        %p388 = scmp.lt.s32.totalorder %s27, 3
        %s389 = scalar_select %p388, %s27, 3
        %s390 = smul.addr %s389, 4
        %s391 = scalar_lea.vmem %s1, %s390
        %p392 = pneg %p74
        %p393 = pneg %p71
        %p394 = pneg %p95
        %p395 = pneg %p92
        %p396 = pneg %p116
        %p397 = pneg %p113
        %p398 = pneg %p137
        %p399 = pneg %p134
        %p400 = pneg %p158
        %p401 = pneg %p155
        %p402 = pneg %p179
        %p403 = pneg %p176
        %p404 = pneg %p200
        %p405 = pneg %p197
        %p406 = pneg %p221
        %p407 = pneg %p218
        %p408 = pneg %p242
        %p409 = pneg %p239
        %p410 = pneg %p263
        %p411 = pneg %p260
        %p412 = pneg %p289
        %p413 = pneg %p286
        %p414 = scmp.lt.s32.totalorder %s27, 3
        %s415 = scalar_select %p414, %s27, 3
        %s416 = smul.addr %s415, 8
        %s417 = scalar_lea.vmem %s11, %s416
        %p418 = pneg %p315
        %p419 = pneg %p312
        %s420 = sand.u32 %s302, 1
        %s421 = scalar_lea.sflag [#allocation3], %s420
        %s422 = sand.u32 %s302, 1
        %s423 = smul.addr %s422, 4
        %s424 = scalar_lea.vmem [#allocation2], %s423
        %p425 = scmp.lt.s32.totalorder %s27, 3
        %s426 = scalar_select %p425, %s27, 3
        %s427 = smul.addr %s426, 4
        %s428 = scalar_lea.vmem %s0, %s427
        %p429 = scmp.lt.s32.totalorder %s27, 3
        %s430 = scalar_select %p429, %s27, 3
        %s431 = smul.addr %s430, 4
        %s432 = scalar_lea.vmem %s1, %s431
        %p433 = scmp.lt.s32.totalorder %s27, 3
        %s434 = scalar_select %p433, %s27, 3
        %s435 = smul.addr %s434, 8
        %s436 = scalar_lea.vmem %s11, %s435
        %v438 = vld [vmem:[%s428] sm:$0xf]
        %v439 = vld [vmem:[%s2] sm:$0xf]
        %v440 = vld [vmem:[%s2 + $0x4] sm:$0xf]
        %v441 = vld [vmem:[%s2 + $0x8] sm:$0xf]
        %v442 = vld [vmem:[%s2 + $0xc] sm:$0xf]
        %v443 = vld [vmem:[%s2 + $0x10] sm:$0xf]
        %v444 = vld [vmem:[%s2 + $0x14] sm:$0xf]
        %v445 = vld [vmem:[%s2 + $0x18] sm:$0xf]
        %v446 = vld [vmem:[%s2 + $0x1c] sm:$0xf]
        %v447 = vld [vmem:[%s2 + $0x20] sm:$0xf]
        %v448 = vld [vmem:[%s2 + $0x24] sm:$0xf]
        %v449 = vld [vmem:[%s2 + $0x28] sm:$0xf]
        %v450 = vld [vmem:[%s2 + $0x2c] sm:$0xf]
        %v451 = vld [vmem:[%s2 + $0x30] sm:$0xf]
        %v452 = vld [vmem:[%s2 + $0x34] sm:$0xf]
        %v453 = vld [vmem:[%s2 + $0x38] sm:$0xf]
        %v454 = vld [vmem:[%s2 + $0x3c] sm:$0xf]
        %v455 = vld [vmem:[%s432] sm:$0xf]
        %v456 = vld [vmem:[%s3] sm:$0xf]
        %v457 = vld [vmem:[%s3 + $0x4] sm:$0xf]
        %v460 = vunpack.c.l.b16 %v456
        %v461 = vunpack.c.l.b16 %v457
        %v462 = vpack.c.b16 %v461, %v460
        %vm464 = vcmask 130048
        %v466 = vsel %vm464, %v455, 0
        %468 = vmatprep.subr.bf16.mxu0 0
        %469 = vmatpush1.bf16.msra.mxu0 %v462
        %470 = vmatprep.subr.bf16.mxu0 0
        %471 = vmatpush1.bf16.msra.mxu0 0
        %472 = vmatprep.subr.bf16.mxu0 0
        %473 = vmatpush1.bf16.msra.mxu0 0
        %474 = vmatprep.subr.bf16.mxu0 0
        %475 = vmatpush1.bf16.msra.mxu0 0
        %476 = vmatprep.subr.bf16.mxu0 0
        %477 = vmatpush1.bf16.msra.mxu0 0
        %478 = vmatprep.subr.bf16.mxu0 0
        %479 = vmatpush1.bf16.msra.mxu0 0
        %480 = vmatprep.subr.bf16.mxu0 0
        %481 = vmatpush1.bf16.msra.mxu0 0
        %482 = vmatprep.subr.bf16.mxu0 0
        %483 = vmatpush1.bf16.msra.mxu0 0
        %484 = vmatprep.subr.bf16.mxu0 0
        %485 = vmatpush1.bf16.msra.mxu0 0
        %486 = vmatprep.subr.bf16.mxu0 0
        %487 = vmatpush1.bf16.msra.mxu0 0
        %488 = vmatprep.subr.bf16.mxu0 0
        %489 = vmatpush1.bf16.msra.mxu0 0
        %490 = vmatprep.subr.bf16.mxu0 0
        %491 = vmatpush1.bf16.msra.mxu0 0
        %492 = vmatprep.subr.bf16.mxu0 0
        %493 = vmatpush1.bf16.msra.mxu0 0
        %494 = vmatprep.subr.bf16.mxu0 0
        %495 = vmatpush1.bf16.msra.mxu0 0
        %496 = vmatprep.subr.bf16.mxu0 0
        %497 = vmatpush1.bf16.msra.mxu0 0
        %498 = vmatprep.subr.bf16.mxu0 0
        %499 = vmatpush1.bf16.msra.mxu0 0
        %500 = vmatprep.mubr.bf16.mxu0 0
        %501 = vmatmul.mubr.bf16.gmra.mrb[0].mxu0 %v466
        %v502 = vpop.f32.mrb[0].mxu0
        %v503 = vadd.f32 0.0, %v502
        %v504 = vpop.f32.mrb[0].mxu0
        %v505 = vpop.f32.mrb[0].mxu0
        %v506 = vpop.f32.mrb[0].mxu0
        %507 = vdwg.mxu0
        %v524 = vunpack.c.l.b16 %v439
        %v525 = vunpack.c.l.b16 %v440
        %v526 = vunpack.c.l.b16 %v441
        %v527 = vunpack.c.l.b16 %v442
        %v528 = vunpack.c.l.b16 %v443
        %v529 = vunpack.c.l.b16 %v444
        %v530 = vunpack.c.l.b16 %v445
        %v531 = vunpack.c.l.b16 %v446
        %v532 = vunpack.c.l.b16 %v447
        %v533 = vunpack.c.l.b16 %v448
        %v534 = vunpack.c.l.b16 %v449
        %v535 = vunpack.c.l.b16 %v450
        %v536 = vunpack.c.l.b16 %v451
        %v537 = vunpack.c.l.b16 %v452
        %v538 = vunpack.c.l.b16 %v453
        %v539 = vunpack.c.l.b16 %v454
        %v540 = vpack.c.b16 %v525, %v524
        %v541 = vpack.c.b16 %v527, %v526
        %v542 = vpack.c.b16 %v529, %v528
        %v543 = vpack.c.b16 %v531, %v530
        %v544 = vpack.c.b16 %v533, %v532
        %v545 = vpack.c.b16 %v535, %v534
        %v546 = vpack.c.b16 %v537, %v536
        %v547 = vpack.c.b16 %v539, %v538
        %556 = vmatprep.subr.bf16.mxu0 0
        %557 = vmatpush1.bf16.msra.mxu0 %v540
        %558 = vmatprep.subr.bf16.mxu0 0
        %559 = vmatpush1.bf16.msra.mxu0 %v541
        %560 = vmatprep.subr.bf16.mxu0 0
        %561 = vmatpush1.bf16.msra.mxu0 %v542
        %562 = vmatprep.subr.bf16.mxu0 0
        %563 = vmatpush1.bf16.msra.mxu0 %v543
        %564 = vmatprep.subr.bf16.mxu0 0
        %565 = vmatpush1.bf16.msra.mxu0 %v544
        %566 = vmatprep.subr.bf16.mxu0 0
        %567 = vmatpush1.bf16.msra.mxu0 %v545
        %568 = vmatprep.subr.bf16.mxu0 0
        %569 = vmatpush1.bf16.msra.mxu0 %v546
        %570 = vmatprep.subr.bf16.mxu0 0
        %571 = vmatpush1.bf16.msra.mxu0 %v547
        %572 = vmatprep.subr.bf16.mxu0 0
        %573 = vmatpush1.bf16.msra.mxu0 0
        %574 = vmatprep.subr.bf16.mxu0 0
        %575 = vmatpush1.bf16.msra.mxu0 0
        %576 = vmatprep.subr.bf16.mxu0 0
        %577 = vmatpush1.bf16.msra.mxu0 0
        %578 = vmatprep.subr.bf16.mxu0 0
        %579 = vmatpush1.bf16.msra.mxu0 0
        %580 = vmatprep.subr.bf16.mxu0 0
        %581 = vmatpush1.bf16.msra.mxu0 0
        %582 = vmatprep.subr.bf16.mxu0 0
        %583 = vmatpush1.bf16.msra.mxu0 0
        %584 = vmatprep.subr.bf16.mxu0 0
        %585 = vmatpush1.bf16.msra.mxu0 0
        %586 = vmatprep.subr.bf16.mxu0 0
        %587 = vmatpush1.bf16.msra.mxu0 0
        %588 = vmatprep.mubr.bf16.mxu0 0
        %589 = vmatmul.mubr.bf16.gmra.mrb[0].mxu0 %v438
        %v590 = vpop.f32.mrb[0].mxu0
        %v591 = vadd.f32 %v503, %v590
        %v592 = vpop.f32.mrb[0].mxu0
        %v593 = vpop.f32.mrb[0].mxu0
        %v594 = vpop.f32.mrb[0].mxu0
        %595 = vdwg.mxu0
        %v596 = vld [vmem:[%s4] sm:$0x1]
        %v598 = vlaneseq
        %v599 = vshrl.u32 %v598, 7
        %v600 = vsub.s32 0, %v599
        %v601 = vrot.slane %v596, %v600
        %v603 = vadd.f32 %v591, %v601
        %v604 = vmax.f32 %v603, 0.0
        %v605 = vpack.c.bf16 %v604, %v604
        %v606 = vld [vmem:[%s5] sm:$0xf]
        %v607 = vld [vmem:[%s5 + $0x4] sm:$0xf]
        %v608 = vld [vmem:[%s5 + $0x8] sm:$0xf]
        %v609 = vld [vmem:[%s5 + $0xc] sm:$0xf]
        %v610 = vld [vmem:[%s5 + $0x10] sm:$0xf]
        %v611 = vld [vmem:[%s5 + $0x14] sm:$0xf]
        %v612 = vld [vmem:[%s5 + $0x18] sm:$0xf]
        %v613 = vld [vmem:[%s5 + $0x1c] sm:$0xf]
        %v614 = vld [vmem:[%s5 + $0x20] sm:$0xf]
        %v615 = vld [vmem:[%s5 + $0x24] sm:$0xf]
        %v616 = vld [vmem:[%s5 + $0x28] sm:$0xf]
        %v617 = vld [vmem:[%s5 + $0x2c] sm:$0xf]
        %v618 = vld [vmem:[%s5 + $0x30] sm:$0xf]
        %v619 = vld [vmem:[%s5 + $0x34] sm:$0xf]
        %v620 = vld [vmem:[%s5 + $0x38] sm:$0xf]
        %v621 = vld [vmem:[%s5 + $0x3c] sm:$0xf]
        %v622 = vld [vmem:[%s6] sm:$0x1]
        %v624 = vlaneseq
        %v625 = vshrl.u32 %v624, 7
        %v626 = vsub.s32 0, %v625
        %v627 = vrot.slane %v622, %v626
        %v645 = vunpack.c.l.b16 %v606
        %v646 = vunpack.c.l.b16 %v607
        %v647 = vunpack.c.l.b16 %v608
        %v648 = vunpack.c.l.b16 %v609
        %v649 = vunpack.c.l.b16 %v610
        %v650 = vunpack.c.l.b16 %v611
        %v651 = vunpack.c.l.b16 %v612
        %v652 = vunpack.c.l.b16 %v613
        %v653 = vunpack.c.l.b16 %v614
        %v654 = vunpack.c.l.b16 %v615
        %v655 = vunpack.c.l.b16 %v616
        %v656 = vunpack.c.l.b16 %v617
        %v657 = vunpack.c.l.b16 %v618
        %v658 = vunpack.c.l.b16 %v619
        %v659 = vunpack.c.l.b16 %v620
        %v660 = vunpack.c.l.b16 %v621
        %v661 = vpack.c.b16 %v646, %v645
        %v662 = vpack.c.b16 %v648, %v647
        %v663 = vpack.c.b16 %v650, %v649
        %v664 = vpack.c.b16 %v652, %v651
        %v665 = vpack.c.b16 %v654, %v653
        %v666 = vpack.c.b16 %v656, %v655
        %v667 = vpack.c.b16 %v658, %v657
        %v668 = vpack.c.b16 %v660, %v659
        %677 = vmatprep.subr.bf16.mxu0 0
        %678 = vmatpush1.bf16.msra.mxu0 %v661
        %679 = vmatprep.subr.bf16.mxu0 0
        %680 = vmatpush1.bf16.msra.mxu0 %v662
        %681 = vmatprep.subr.bf16.mxu0 0
        %682 = vmatpush1.bf16.msra.mxu0 %v663
        %683 = vmatprep.subr.bf16.mxu0 0
        %684 = vmatpush1.bf16.msra.mxu0 %v664
        %685 = vmatprep.subr.bf16.mxu0 0
        %686 = vmatpush1.bf16.msra.mxu0 %v665
        %687 = vmatprep.subr.bf16.mxu0 0
        %688 = vmatpush1.bf16.msra.mxu0 %v666
        %689 = vmatprep.subr.bf16.mxu0 0
        %690 = vmatpush1.bf16.msra.mxu0 %v667
        %691 = vmatprep.subr.bf16.mxu0 0
        %692 = vmatpush1.bf16.msra.mxu0 %v668
        %693 = vmatprep.subr.bf16.mxu0 0
        %694 = vmatpush1.bf16.msra.mxu0 0
        %695 = vmatprep.subr.bf16.mxu0 0
        %696 = vmatpush1.bf16.msra.mxu0 0
        %697 = vmatprep.subr.bf16.mxu0 0
        %698 = vmatpush1.bf16.msra.mxu0 0
        %699 = vmatprep.subr.bf16.mxu0 0
        %700 = vmatpush1.bf16.msra.mxu0 0
        %701 = vmatprep.subr.bf16.mxu0 0
        %702 = vmatpush1.bf16.msra.mxu0 0
        %703 = vmatprep.subr.bf16.mxu0 0
        %704 = vmatpush1.bf16.msra.mxu0 0
        %705 = vmatprep.subr.bf16.mxu0 0
        %706 = vmatpush1.bf16.msra.mxu0 0
        %707 = vmatprep.subr.bf16.mxu0 0
        %708 = vmatpush1.bf16.msra.mxu0 0
        %709 = vmatprep.mubr.bf16.mxu0 0
        %710 = vmatmul.mubr.bf16.gmra.mrb[0].mxu0 %v605
        %v711 = vpop.f32.mrb[0].mxu0
        %v712 = vadd.f32 %v627, %v711
        %v713 = vpop.f32.mrb[0].mxu0
        %v714 = vpop.f32.mrb[0].mxu0
        %v715 = vpop.f32.mrb[0].mxu0
        %716 = vdwg.mxu0
        %v717 = vmax.f32 %v712, 0.0
        %v718 = vpack.c.bf16 %v717, %v717
        %v719 = vld [vmem:[%s7] sm:$0xf]
        %v720 = vld [vmem:[%s7 + $0x4] sm:$0xf]
        %v721 = vld [vmem:[%s7 + $0x8] sm:$0xf]
        %v722 = vld [vmem:[%s7 + $0xc] sm:$0xf]
        %v723 = vld [vmem:[%s7 + $0x10] sm:$0xf]
        %v724 = vld [vmem:[%s7 + $0x14] sm:$0xf]
        %v725 = vld [vmem:[%s7 + $0x18] sm:$0xf]
        %v726 = vld [vmem:[%s7 + $0x1c] sm:$0xf]
        %v727 = vld [vmem:[%s7 + $0x20] sm:$0xf]
        %v728 = vld [vmem:[%s7 + $0x24] sm:$0xf]
        %v729 = vld [vmem:[%s7 + $0x28] sm:$0xf]
        %v730 = vld [vmem:[%s7 + $0x2c] sm:$0xf]
        %v731 = vld [vmem:[%s7 + $0x30] sm:$0xf]
        %v732 = vld [vmem:[%s7 + $0x34] sm:$0xf]
        %v733 = vld [vmem:[%s7 + $0x38] sm:$0xf]
        %v734 = vld [vmem:[%s7 + $0x3c] sm:$0xf]
        %v735 = vld [vmem:[%s8] sm:$0x1]
        %v737 = vlaneseq
        %v738 = vshrl.u32 %v737, 7
        %v739 = vsub.s32 0, %v738
        %v740 = vrot.slane %v735, %v739
        %v758 = vunpack.c.l.b16 %v719
        %v759 = vunpack.c.l.b16 %v720
        %v760 = vunpack.c.l.b16 %v721
        %v761 = vunpack.c.l.b16 %v722
        %v762 = vunpack.c.l.b16 %v723
        %v763 = vunpack.c.l.b16 %v724
        %v764 = vunpack.c.l.b16 %v725
        %v765 = vunpack.c.l.b16 %v726
        %v766 = vunpack.c.l.b16 %v727
        %v767 = vunpack.c.l.b16 %v728
        %v768 = vunpack.c.l.b16 %v729
        %v769 = vunpack.c.l.b16 %v730
        %v770 = vunpack.c.l.b16 %v731
        %v771 = vunpack.c.l.b16 %v732
        %v772 = vunpack.c.l.b16 %v733
        %v773 = vunpack.c.l.b16 %v734
        %v774 = vpack.c.b16 %v759, %v758
        %v775 = vpack.c.b16 %v761, %v760
        %v776 = vpack.c.b16 %v763, %v762
        %v777 = vpack.c.b16 %v765, %v764
        %v778 = vpack.c.b16 %v767, %v766
        %v779 = vpack.c.b16 %v769, %v768
        %v780 = vpack.c.b16 %v771, %v770
        %v781 = vpack.c.b16 %v773, %v772
        %790 = vmatprep.subr.bf16.mxu0 0
        %791 = vmatpush1.bf16.msra.mxu0 %v774
        %792 = vmatprep.subr.bf16.mxu0 0
        %793 = vmatpush1.bf16.msra.mxu0 %v775
        %794 = vmatprep.subr.bf16.mxu0 0
        %795 = vmatpush1.bf16.msra.mxu0 %v776
        %796 = vmatprep.subr.bf16.mxu0 0
        %797 = vmatpush1.bf16.msra.mxu0 %v777
        %798 = vmatprep.subr.bf16.mxu0 0
        %799 = vmatpush1.bf16.msra.mxu0 %v778
        %800 = vmatprep.subr.bf16.mxu0 0
        %801 = vmatpush1.bf16.msra.mxu0 %v779
        %802 = vmatprep.subr.bf16.mxu0 0
        %803 = vmatpush1.bf16.msra.mxu0 %v780
        %804 = vmatprep.subr.bf16.mxu0 0
        %805 = vmatpush1.bf16.msra.mxu0 %v781
        %806 = vmatprep.subr.bf16.mxu0 0
        %807 = vmatpush1.bf16.msra.mxu0 0
        %808 = vmatprep.subr.bf16.mxu0 0
        %809 = vmatpush1.bf16.msra.mxu0 0
        %810 = vmatprep.subr.bf16.mxu0 0
        %811 = vmatpush1.bf16.msra.mxu0 0
        %812 = vmatprep.subr.bf16.mxu0 0
        %813 = vmatpush1.bf16.msra.mxu0 0
        %814 = vmatprep.subr.bf16.mxu0 0
        %815 = vmatpush1.bf16.msra.mxu0 0
        %816 = vmatprep.subr.bf16.mxu0 0
        %817 = vmatpush1.bf16.msra.mxu0 0
        %818 = vmatprep.subr.bf16.mxu0 0
        %819 = vmatpush1.bf16.msra.mxu0 0
        %820 = vmatprep.subr.bf16.mxu0 0
        %821 = vmatpush1.bf16.msra.mxu0 0
        %822 = vmatprep.mubr.bf16.mxu0 0
        %823 = vmatmul.mubr.bf16.gmra.mrb[0].mxu0 %v718
        %v824 = vpop.f32.mrb[0].mxu0
        %v825 = vadd.f32 %v740, %v824
        %v826 = vpop.f32.mrb[0].mxu0
        %v827 = vpop.f32.mrb[0].mxu0
        %v828 = vpop.f32.mrb[0].mxu0
        %829 = vdwg.mxu0
        %vm830 = vcmask 64512
        %831 = vst.msk [vmem:[%s436] sm:$0xff] %vm830, %v825
        %v832 = vld [vmem:[%s9] sm:$0xf]
        %v833 = vld [vmem:[%s9 + $0x4] sm:$0xf]
        %v834 = vld [vmem:[%s9 + $0x8] sm:$0xf]
        %v835 = vld [vmem:[%s9 + $0xc] sm:$0xf]
        %v836 = vld [vmem:[%s9 + $0x10] sm:$0xf]
        %v837 = vld [vmem:[%s9 + $0x14] sm:$0xf]
        %v838 = vld [vmem:[%s9 + $0x18] sm:$0xf]
        %v839 = vld [vmem:[%s9 + $0x1c] sm:$0xf]
        %v840 = vld [vmem:[%s9 + $0x20] sm:$0xf]
        %v841 = vld [vmem:[%s9 + $0x24] sm:$0xf]
        %v842 = vld [vmem:[%s9 + $0x28] sm:$0xf]
        %v843 = vld [vmem:[%s9 + $0x2c] sm:$0xf]
        %v844 = vld [vmem:[%s9 + $0x30] sm:$0xf]
        %v845 = vld [vmem:[%s9 + $0x34] sm:$0xf]
        %v846 = vld [vmem:[%s9 + $0x38] sm:$0xf]
        %v847 = vld [vmem:[%s9 + $0x3c] sm:$0xf]
        %v848 = vld [vmem:[%s10] sm:$0x1]
        %v850 = vlaneseq
        %v851 = vshrl.u32 %v850, 7
        %v852 = vsub.s32 0, %v851
        %v853 = vrot.slane %v848, %v852
        %v871 = vunpack.c.l.b16 %v832
        %v872 = vunpack.c.l.b16 %v833
        %v873 = vunpack.c.l.b16 %v834
        %v874 = vunpack.c.l.b16 %v835
        %v875 = vunpack.c.l.b16 %v836
        %v876 = vunpack.c.l.b16 %v837
        %v877 = vunpack.c.l.b16 %v838
        %v878 = vunpack.c.l.b16 %v839
        %v879 = vunpack.c.l.b16 %v840
        %v880 = vunpack.c.l.b16 %v841
        %v881 = vunpack.c.l.b16 %v842
        %v882 = vunpack.c.l.b16 %v843
        %v883 = vunpack.c.l.b16 %v844
        %v884 = vunpack.c.l.b16 %v845
        %v885 = vunpack.c.l.b16 %v846
        %v886 = vunpack.c.l.b16 %v847
        %v887 = vpack.c.b16 %v872, %v871
        %v888 = vpack.c.b16 %v874, %v873
        %v889 = vpack.c.b16 %v876, %v875
        %v890 = vpack.c.b16 %v878, %v877
        %v891 = vpack.c.b16 %v880, %v879
        %v892 = vpack.c.b16 %v882, %v881
        %v893 = vpack.c.b16 %v884, %v883
        %v894 = vpack.c.b16 %v886, %v885
        %903 = vmatprep.subr.bf16.mxu0 0
        %904 = vmatpush1.bf16.msra.mxu0 %v887
        %905 = vmatprep.subr.bf16.mxu0 0
        %906 = vmatpush1.bf16.msra.mxu0 %v888
        %907 = vmatprep.subr.bf16.mxu0 0
        %908 = vmatpush1.bf16.msra.mxu0 %v889
        %909 = vmatprep.subr.bf16.mxu0 0
        %910 = vmatpush1.bf16.msra.mxu0 %v890
        %911 = vmatprep.subr.bf16.mxu0 0
        %912 = vmatpush1.bf16.msra.mxu0 %v891
        %913 = vmatprep.subr.bf16.mxu0 0
        %914 = vmatpush1.bf16.msra.mxu0 %v892
        %915 = vmatprep.subr.bf16.mxu0 0
        %916 = vmatpush1.bf16.msra.mxu0 %v893
        %917 = vmatprep.subr.bf16.mxu0 0
        %918 = vmatpush1.bf16.msra.mxu0 %v894
        %919 = vmatprep.subr.bf16.mxu0 0
        %920 = vmatpush1.bf16.msra.mxu0 0
        %921 = vmatprep.subr.bf16.mxu0 0
        %922 = vmatpush1.bf16.msra.mxu0 0
        %923 = vmatprep.subr.bf16.mxu0 0
        %924 = vmatpush1.bf16.msra.mxu0 0
        %925 = vmatprep.subr.bf16.mxu0 0
        %926 = vmatpush1.bf16.msra.mxu0 0
        %927 = vmatprep.subr.bf16.mxu0 0
        %928 = vmatpush1.bf16.msra.mxu0 0
        %929 = vmatprep.subr.bf16.mxu0 0
        %930 = vmatpush1.bf16.msra.mxu0 0
        %931 = vmatprep.subr.bf16.mxu0 0
        %932 = vmatpush1.bf16.msra.mxu0 0
        %933 = vmatprep.subr.bf16.mxu0 0
        %934 = vmatpush1.bf16.msra.mxu0 0
        %935 = vmatprep.mubr.bf16.mxu0 0
        %936 = vmatmul.mubr.bf16.gmra.mrb[0].mxu0 %v718
        %v937 = vpop.f32.mrb[0].mxu0
        %v938 = vadd.f32 %v853, %v937
        %v939 = vpop.f32.mrb[0].mxu0
        %v940 = vpop.f32.mrb[0].mxu0
        %v941 = vpop.f32.mrb[0].mxu0
        %942 = vdwg.mxu0
        %v943 = vsub.f32 0.0, %v938
        %v944 = vmul.f32 %v943, 1.442695
        %v945 = vpow.pop %v944
        %v946 = vadd.f32 %v945, 1.0
        %v947 = vrcp.pop %v946
        %v948 = vmul.f32 1.0, %v947
        %v949 = vpack.c.bf16 %v948, %v948
        %vm950 = vcmask 125952
        %951 = vst.msk [vmem:[%s424] sm:$0xf] %vm950, %v949
        %p952 = scmp.lt.s32.totalorder %s27, 3
        %s953 = scalar_select %p952, %s27, 3
        %s954 = smul.addr %s953, 8
        %s955 = scalar_lea.vmem %s11, %s954
        %s956 = sand.u32 %s302, 1
        %s957 = scalar_lea.sflag [#allocation3], %s956
        %s958 = sand.u32 %s302, 1
        %s959 = smul.addr %s958, 4
        %s960 = scalar_lea.vmem [#allocation2], %s959
        // Predicated region
        $region65: #{_lambda_.2} parent=63 // pred_check
          %p961 = pneg %p286
        $region66: #{_lambda_.2} parent=63 // pred_check_branch
          %963 = sbr.rel (%p961) target = $region68
        $region67: #{_lambda_.2} parent=63 // pred_region
          _
        $region68: #{_lambda_.2} parent=63 // pred_fallthru
          _
        // Predicated region
        $region69: #{_lambda_.2} parent=63 // pred_check
          %p964 = pneg %p312
        $region70: #{_lambda_.2} parent=63 // pred_check_branch
          %966 = sbr.rel (%p964) target = $region72
        $region71: #{_lambda_.2} parent=63 // pred_region
          %s968 = ssub.s32 64, 64
          %969 = vsyncadd %s957, %s968
          %s970 = smul.addr %s27, 64
          %s971 = scalar_lea.hbm %s12, %s970
          %s973 = sshll.u32 %s960, 4
          %s974 = int_to_ptr.vmem [resolvable:$true] %s973
          %976 = dma.vmem_to_hbm [thread:$0]  %s974, 64, %s971, %s957
        $region72: #{_lambda_.2} parent=63 // pred_fallthru
          _
      $region64: #{_lambda_.2} parent=5 // pred_fallthru
        _
      %p977 = scmp.le.s32.totalorder 2, %s22
      // Predicated region
      $region73: #{_lambda_.2} parent=5 // pred_check
        %p978 = pneg %p977
      $region74: #{_lambda_.2} parent=5 // pred_check_branch
        %980 = sbr.rel (%p978) target = $region76
      $region75: #{_lambda_.2} parent=5 // pred_region
        %s981 = ssub.s32 %s22, 2
        // Predicated region
        $region77: #{_lambda_.2} parent=75 // pred_check
          %p982 = pneg %p292
        $region78: #{_lambda_.2} parent=75 // pred_check_branch
          %984 = sbr.rel (%p982) target = $region80
        $region79: #{_lambda_.2} parent=75 // pred_region
          %p985 = scmp.lt.s32.totalorder %s28, 3
          %s986 = scalar_select %p985, %s28, 3
          %s987 = smul.addr %s986, 8
          %s988 = scalar_lea.vmem %s11, %s987
        $region80: #{_lambda_.2} parent=75 // pred_fallthru
          _
        // Predicated region
        $region81: #{_lambda_.2} parent=75 // pred_check
          %p989 = pneg %p318
        $region82: #{_lambda_.2} parent=75 // pred_check_branch
          %991 = sbr.rel (%p989) target = $region84
        $region83: #{_lambda_.2} parent=75 // pred_region
          %s992 = sand.u32 %s303, 1
          %s993 = scalar_lea.sflag [#allocation3], %s992
          %s994 = sand.u32 %s303, 1
          %s995 = smul.addr %s994, 4
          %s996 = scalar_lea.vmem [#allocation2], %s995
          %997 = dma.done %s993, 64
        $region84: #{_lambda_.2} parent=75 // pred_fallthru
          _
      $region76: #{_lambda_.2} parent=5 // pred_fallthru
        _
    $region6: #{_lambda_.2} parent=1 // loop_footer
      %s26 = sadd.s32 1, %s22
    $region7: #{_lambda_.2} parent=1 // loop_footer_branch
      %21 = sbr.rel target = $region3
    $region8: #{_lambda_.2} parent=1 // loop_exit
      _
    %998 = vsyncpa [#allocation3], 1
    %s999 = scalar_lea.sflag [#allocation3], 1
    %1000 = vsyncpa %s999, 1

// kernel: _lambda_.3
$region0: #{_lambda_.3}
  #allocation0 [shape = 'u32[]', space=smem, size = 0x4, offset = 0x4, fixed_abs, tag = 'smem constant byte address 0x4 - core index']
  #allocation1 [shape = 'u32[144,128]{1,0:T(1,128)}', space=vmem, size = 0x12000, scoped, tag = 'internal scratch']
  %s0 = inlined_call_operand.vmem [shape: bf16[32,128], index: 0, kind: input, shape index: {}]
  %s1 = inlined_call_operand.vmem [shape: bf16[32,16], index: 1, kind: input, shape index: {}]
  %s2 = inlined_call_operand.vmem [shape: bf16[16,64], index: 2, kind: input, shape index: {}]
  %s3 = inlined_call_operand.vmem [shape: bf16[128,64], index: 3, kind: input, shape index: {}]
  %s4 = inlined_call_operand.vmem [shape: bf16[64,64], index: 4, kind: input, shape index: {}]
  %s5 = inlined_call_operand.vmem [shape: bf16[64,128], index: 5, kind: input, shape index: {}]
  %s6 = inlined_call_operand.vmem [shape: f32[32,128], index: 6, kind: output, shape index: {}]
  %s7 = sld [smem:[#allocation0]]
  $region57: #{_lambda_.3} parent=0
    _
  %s9 = ssub.s32 1, %s7
  %s10 = scalar_select 0, %s9, %s7
  loop: start=0, step=1, limit=6
  $region2: #{_lambda_.3} parent=0 // loop_pre_header
    _
  $region3: #{_lambda_.3} parent=0 // loop_header
    %s12 = sphi 0, %s16
    %p13 = scmp.ge.s32.totalorder %s12, 6
    %s22 = sphi 0, %s24
    %s25 = sphi 0, %s22
    %s26 = sphi 0, %s25
    %s42 = sphi 0, %s26
    %s48 = sphi 0, %s50
    %s51 = sphi 0, %s48
    %s52 = sphi 0, %s51
    %s68 = sphi 0, %s52
    %s72 = sphi 0, %s72
    %s74 = sphi 0, %s72
    %s75 = sphi 0, %s74
    %s89 = sphi 0, %s75
    %s93 = sphi 0, %s93
    %s95 = sphi 0, %s93
    %s96 = sphi 0, %s95
    %s110 = sphi 0, %s96
    %s114 = sphi 0, %s114
    %s116 = sphi 0, %s114
    %s117 = sphi 0, %s116
    %s131 = sphi 0, %s117
    %s135 = sphi 0, %s135
    %s137 = sphi 0, %s135
    %s138 = sphi 0, %s137
    %s152 = sphi 0, %s138
    %s158 = sphi 0, %s160
    %s161 = sphi 0, %s158
    %s162 = sphi 0, %s161
    %s178 = sphi 0, %s162
  $region4: #{_lambda_.3} parent=0 // loop_header_branch
    %15 = sbr.rel (%p13) target = $region8
  $region5: #{_lambda_.3} parent=0 // loop_body
    %s17 = ssub.s32 %s12, 1
    %s18 = ssub.s32 %s12, 2
    %s19 = sadd.s32 %s12, 1
    %s20 = ssub.s32 %s12, %s19
    %p21 = scmp.eq.s32.totalorder %s20, 0
    %s23 = sadd.s32 %s22, 1
    %s24 = scalar_select %p21, %s22, %s23
    %p27 = pneg %p21
    %p28 = scmp.eq.s32.totalorder %s12, 3
    %p29 = por %p27, %p28
    %p30 = scmp.ne.s32.totalorder %s22, %s25
    %p31 = scmp.eq.s32.totalorder %s12, 0
    %p32 = por %p30, %p31
    %p33 = scmp.ne.s32.totalorder %s22, %s25
    %p34 = scmp.eq.s32.totalorder %s17, 3
    %p35 = por %p33, %p34
    %p36 = scmp.ne.s32.totalorder %s25, %s26
    %p37 = scmp.eq.s32.totalorder %s17, 0
    %p38 = por %p36, %p37
    %p39 = scmp.ne.s32.totalorder %s25, %s26
    %p40 = scmp.eq.s32.totalorder %s18, 3
    %p41 = por %p39, %p40
    %p43 = scmp.ne.s32.totalorder %s26, %s42
    %p44 = scmp.eq.s32.totalorder %s18, 0
    %p45 = por %p43, %p44
    %s46 = ssub.s32 %s12, %s19
    %p47 = scmp.eq.s32.totalorder %s46, 0
    %s49 = sadd.s32 %s48, 1
    %s50 = scalar_select %p47, %s48, %s49
    %p53 = pneg %p47
    %p54 = scmp.eq.s32.totalorder %s12, 3
    %p55 = por %p53, %p54
    %p56 = scmp.ne.s32.totalorder %s48, %s51
    %p57 = scmp.eq.s32.totalorder %s12, 0
    %p58 = por %p56, %p57
    %p59 = scmp.ne.s32.totalorder %s48, %s51
    %p60 = scmp.eq.s32.totalorder %s17, 3
    %p61 = por %p59, %p60
    %p62 = scmp.ne.s32.totalorder %s51, %s52
    %p63 = scmp.eq.s32.totalorder %s17, 0
    %p64 = por %p62, %p63
    %p65 = scmp.ne.s32.totalorder %s51, %s52
    %p66 = scmp.eq.s32.totalorder %s18, 3
    %p67 = por %p65, %p66
    %p69 = scmp.ne.s32.totalorder %s52, %s68
    %p70 = scmp.eq.s32.totalorder %s18, 0
    %p71 = por %p69, %p70
    %s73 = sadd.s32 %s72, 1
    %p76 = scmp.eq.s32.totalorder %s12, 3
    %p77 = scmp.ne.s32.totalorder %s72, %s74
    %p78 = scmp.eq.s32.totalorder %s12, 0
    %p79 = por %p77, %p78
    %p80 = scmp.ne.s32.totalorder %s72, %s74
    %p81 = scmp.eq.s32.totalorder %s17, 3
    %p82 = por %p80, %p81
    %p83 = scmp.ne.s32.totalorder %s74, %s75
    %p84 = scmp.eq.s32.totalorder %s17, 0
    %p85 = por %p83, %p84
    %p86 = scmp.ne.s32.totalorder %s74, %s75
    %p87 = scmp.eq.s32.totalorder %s18, 3
    %p88 = por %p86, %p87
    %p90 = scmp.ne.s32.totalorder %s75, %s89
    %p91 = scmp.eq.s32.totalorder %s18, 0
    %p92 = por %p90, %p91
    %s94 = sadd.s32 %s93, 1
    %p97 = scmp.eq.s32.totalorder %s12, 3
    %p98 = scmp.ne.s32.totalorder %s93, %s95
    %p99 = scmp.eq.s32.totalorder %s12, 0
    %p100 = por %p98, %p99
    %p101 = scmp.ne.s32.totalorder %s93, %s95
    %p102 = scmp.eq.s32.totalorder %s17, 3
    %p103 = por %p101, %p102
    %p104 = scmp.ne.s32.totalorder %s95, %s96
    %p105 = scmp.eq.s32.totalorder %s17, 0
    %p106 = por %p104, %p105
    %p107 = scmp.ne.s32.totalorder %s95, %s96
    %p108 = scmp.eq.s32.totalorder %s18, 3
    %p109 = por %p107, %p108
    %p111 = scmp.ne.s32.totalorder %s96, %s110
    %p112 = scmp.eq.s32.totalorder %s18, 0
    %p113 = por %p111, %p112
    %s115 = sadd.s32 %s114, 1
    %p118 = scmp.eq.s32.totalorder %s12, 3
    %p119 = scmp.ne.s32.totalorder %s114, %s116
    %p120 = scmp.eq.s32.totalorder %s12, 0
    %p121 = por %p119, %p120
    %p122 = scmp.ne.s32.totalorder %s114, %s116
    %p123 = scmp.eq.s32.totalorder %s17, 3
    %p124 = por %p122, %p123
    %p125 = scmp.ne.s32.totalorder %s116, %s117
    %p126 = scmp.eq.s32.totalorder %s17, 0
    %p127 = por %p125, %p126
    %p128 = scmp.ne.s32.totalorder %s116, %s117
    %p129 = scmp.eq.s32.totalorder %s18, 3
    %p130 = por %p128, %p129
    %p132 = scmp.ne.s32.totalorder %s117, %s131
    %p133 = scmp.eq.s32.totalorder %s18, 0
    %p134 = por %p132, %p133
    %s136 = sadd.s32 %s135, 1
    %p139 = scmp.eq.s32.totalorder %s12, 3
    %p140 = scmp.ne.s32.totalorder %s135, %s137
    %p141 = scmp.eq.s32.totalorder %s12, 0
    %p142 = por %p140, %p141
    %p143 = scmp.ne.s32.totalorder %s135, %s137
    %p144 = scmp.eq.s32.totalorder %s17, 3
    %p145 = por %p143, %p144
    %p146 = scmp.ne.s32.totalorder %s137, %s138
    %p147 = scmp.eq.s32.totalorder %s17, 0
    %p148 = por %p146, %p147
    %p149 = scmp.ne.s32.totalorder %s137, %s138
    %p150 = scmp.eq.s32.totalorder %s18, 3
    %p151 = por %p149, %p150
    %p153 = scmp.ne.s32.totalorder %s138, %s152
    %p154 = scmp.eq.s32.totalorder %s18, 0
    %p155 = por %p153, %p154
    %s156 = ssub.s32 %s12, %s19
    %p157 = scmp.eq.s32.totalorder %s156, 0
    %s159 = sadd.s32 %s158, 1
    %s160 = scalar_select %p157, %s158, %s159
    %p163 = pneg %p157
    %p164 = scmp.eq.s32.totalorder %s12, 3
    %p165 = por %p163, %p164
    %p166 = scmp.ne.s32.totalorder %s158, %s161
    %p167 = scmp.eq.s32.totalorder %s12, 0
    %p168 = por %p166, %p167
    %p169 = scmp.ne.s32.totalorder %s158, %s161
    %p170 = scmp.eq.s32.totalorder %s17, 3
    %p171 = por %p169, %p170
    %p172 = scmp.ne.s32.totalorder %s161, %s162
    %p173 = scmp.eq.s32.totalorder %s17, 0
    %p174 = por %p172, %p173
    %p175 = scmp.ne.s32.totalorder %s161, %s162
    %p176 = scmp.eq.s32.totalorder %s18, 3
    %p177 = por %p175, %p176
    %p179 = scmp.ne.s32.totalorder %s162, %s178
    %p180 = scmp.eq.s32.totalorder %s18, 0
    %p181 = por %p179, %p180
    %p182 = scmp.le.s32.totalorder 1, %s12
    %p183 = scmp.lt.s32.totalorder %s12, 5
    %p184 = pnand %p182, %p183
    %p185 = pneg %p184
    // Predicated region
    $region9: #{_lambda_.3} parent=5 // pred_check
      _
    $region10: #{_lambda_.3} parent=5 // pred_check_branch
      %187 = sbr.rel (%p184) target = $region12
    $region11: #{_lambda_.3} parent=5 // pred_region
      %s188 = ssub.s32 %s12, 1
      // Predicated region
      $region13: #{_lambda_.3} parent=11 // pred_check
        %p189 = pneg %p85
      $region14: #{_lambda_.3} parent=11 // pred_check_branch
        %191 = sbr.rel (%p189) target = $region16
      $region15: #{_lambda_.3} parent=11 // pred_region
        _
      $region16: #{_lambda_.3} parent=11 // pred_fallthru
        _
      // Predicated region
      $region17: #{_lambda_.3} parent=11 // pred_check
        %p192 = pneg %p106
      $region18: #{_lambda_.3} parent=11 // pred_check_branch
        %194 = sbr.rel (%p192) target = $region20
      $region19: #{_lambda_.3} parent=11 // pred_region
        _
      $region20: #{_lambda_.3} parent=11 // pred_fallthru
        _
      // Predicated region
      $region21: #{_lambda_.3} parent=11 // pred_check
        %p195 = pneg %p127
      $region22: #{_lambda_.3} parent=11 // pred_check_branch
        %197 = sbr.rel (%p195) target = $region24
      $region23: #{_lambda_.3} parent=11 // pred_region
        _
      $region24: #{_lambda_.3} parent=11 // pred_fallthru
        _
      // Predicated region
      $region25: #{_lambda_.3} parent=11 // pred_check
        %p198 = pneg %p148
      $region26: #{_lambda_.3} parent=11 // pred_check_branch
        %200 = sbr.rel (%p198) target = $region28
      $region27: #{_lambda_.3} parent=11 // pred_region
        _
      $region28: #{_lambda_.3} parent=11 // pred_fallthru
        _
    $region12: #{_lambda_.3} parent=5 // pred_fallthru
      _
    %p201 = scmp.lt.s32.totalorder %s12, 4
    // Predicated region
    $region29: #{_lambda_.3} parent=5 // pred_check
      %p202 = pneg %p201
    $region30: #{_lambda_.3} parent=5 // pred_check_branch
      %204 = sbr.rel (%p202) target = $region32
    $region31: #{_lambda_.3} parent=5 // pred_region
      // Predicated region
      $region33: #{_lambda_.3} parent=31 // pred_check
        %p205 = pneg %p32
      $region34: #{_lambda_.3} parent=31 // pred_check_branch
        %207 = sbr.rel (%p205) target = $region36
      $region35: #{_lambda_.3} parent=31 // pred_region
        %p208 = scmp.lt.s32.totalorder %s12, 3
        %s209 = scalar_select %p208, %s12, 3
        %s210 = smul.addr %s209, 4
        %s211 = scalar_lea.vmem %s0, %s210
      $region36: #{_lambda_.3} parent=31 // pred_fallthru
        _
      // Predicated region
      $region37: #{_lambda_.3} parent=31 // pred_check
        %p212 = pneg %p58
      $region38: #{_lambda_.3} parent=31 // pred_check_branch
        %214 = sbr.rel (%p212) target = $region40
      $region39: #{_lambda_.3} parent=31 // pred_region
        %p215 = scmp.lt.s32.totalorder %s12, 3
        %s216 = scalar_select %p215, %s12, 3
        %s217 = smul.addr %s216, 4
        %s218 = scalar_lea.vmem %s1, %s217
      $region40: #{_lambda_.3} parent=31 // pred_fallthru
        _
    $region32: #{_lambda_.3} parent=5 // pred_fallthru
      _
    %p219 = scmp.le.s32.totalorder 1, %s12
    %p220 = scmp.lt.s32.totalorder %s12, 5
    %p221 = pnand %p219, %p220
    %p222 = pneg %p221
    // Predicated region
    $region41: #{_lambda_.3} parent=5 // pred_check
      _
    $region42: #{_lambda_.3} parent=5 // pred_check_branch
      %224 = sbr.rel (%p221) target = $region44
    $region43: #{_lambda_.3} parent=5 // pred_region
      %s225 = ssub.s32 %s12, 1
      %p226 = scmp.lt.s32.totalorder %s17, 3
      %s227 = scalar_select %p226, %s17, 3
      %s228 = smul.addr %s227, 4
      %s229 = scalar_lea.vmem %s0, %s228
      %p230 = pneg %p38
      %p231 = pneg %p35
      %p232 = scmp.lt.s32.totalorder %s17, 3
      %s233 = scalar_select %p232, %s17, 3
      %s234 = smul.addr %s233, 4
      %s235 = scalar_lea.vmem %s1, %s234
      %p236 = pneg %p64
      %p237 = pneg %p61
      %p238 = pneg %p85
      %p239 = pneg %p82
      %p240 = pneg %p106
      %p241 = pneg %p103
      %p242 = pneg %p127
      %p243 = pneg %p124
      %p244 = pneg %p148
      %p245 = pneg %p145
      %p246 = pneg %p174
      %p247 = pneg %p171
      %p248 = scmp.lt.s32.totalorder %s17, 3
      %s249 = scalar_select %p248, %s17, 3
      %s250 = smul.addr %s249, 8
      %s251 = scalar_lea.vmem %s6, %s250
      %p252 = scmp.lt.s32.totalorder %s17, 3
      %s253 = scalar_select %p252, %s17, 3
      %s254 = smul.addr %s253, 4
      %s255 = scalar_lea.vmem %s0, %s254
      %p256 = scmp.lt.s32.totalorder %s17, 3
      %s257 = scalar_select %p256, %s17, 3
      %s258 = smul.addr %s257, 4
      %s259 = scalar_lea.vmem %s1, %s258
      %p260 = scmp.lt.s32.totalorder %s17, 3
      %s261 = scalar_select %p260, %s17, 3
      %s262 = smul.addr %s261, 8
      %s263 = scalar_lea.vmem %s6, %s262
      %v265 = vld [vmem:[%s259] sm:$0xf]
      %v266 = vld [vmem:[%s2] sm:$0xf]
      %v267 = vld [vmem:[%s2 + $0x4] sm:$0xf]
      %v270 = vunpack.c.l.b16 %v266
      %v271 = vunpack.c.l.b16 %v267
      %v272 = vpack.c.b16 %v271, %v270
      %vm274 = vcmask 130048
      %v276 = vsel %vm274, %v265, 0
      %278 = vmatprep.subr.bf16.mxu0 0
      %279 = vmatpush1.bf16.msra.mxu0 %v272
      %280 = vmatprep.subr.bf16.mxu0 0
      %281 = vmatpush1.bf16.msra.mxu0 0
      %282 = vmatprep.subr.bf16.mxu0 0
      %283 = vmatpush1.bf16.msra.mxu0 0
      %284 = vmatprep.subr.bf16.mxu0 0
      %285 = vmatpush1.bf16.msra.mxu0 0
      %286 = vmatprep.subr.bf16.mxu0 0
      %287 = vmatpush1.bf16.msra.mxu0 0
      %288 = vmatprep.subr.bf16.mxu0 0
      %289 = vmatpush1.bf16.msra.mxu0 0
      %290 = vmatprep.subr.bf16.mxu0 0
      %291 = vmatpush1.bf16.msra.mxu0 0
      %292 = vmatprep.subr.bf16.mxu0 0
      %293 = vmatpush1.bf16.msra.mxu0 0
      %294 = vmatprep.subr.bf16.mxu0 0
      %295 = vmatpush1.bf16.msra.mxu0 0
      %296 = vmatprep.subr.bf16.mxu0 0
      %297 = vmatpush1.bf16.msra.mxu0 0
      %298 = vmatprep.subr.bf16.mxu0 0
      %299 = vmatpush1.bf16.msra.mxu0 0
      %300 = vmatprep.subr.bf16.mxu0 0
      %301 = vmatpush1.bf16.msra.mxu0 0
      %302 = vmatprep.subr.bf16.mxu0 0
      %303 = vmatpush1.bf16.msra.mxu0 0
      %304 = vmatprep.subr.bf16.mxu0 0
      %305 = vmatpush1.bf16.msra.mxu0 0
      %306 = vmatprep.subr.bf16.mxu0 0
      %307 = vmatpush1.bf16.msra.mxu0 0
      %308 = vmatprep.subr.bf16.mxu0 0
      %309 = vmatpush1.bf16.msra.mxu0 0
      %310 = vmatprep.mubr.bf16.mxu0 0
      %311 = vmatmul.mubr.bf16.gmra.mrb[0].mxu0 %v276
      %v312 = vpop.f32.mrb[0].mxu0
      %v313 = vadd.f32 0.0, %v312
      %v314 = vpop.f32.mrb[0].mxu0
      %v315 = vpop.f32.mrb[0].mxu0
      %v316 = vpop.f32.mrb[0].mxu0
      %317 = vdwg.mxu0
      %v318 = vld [vmem:[%s255] sm:$0xf]
      %v319 = vld [vmem:[%s3] sm:$0xf]
      %v320 = vld [vmem:[%s3 + $0x4] sm:$0xf]
      %v321 = vld [vmem:[%s3 + $0x8] sm:$0xf]
      %v322 = vld [vmem:[%s3 + $0xc] sm:$0xf]
      %v323 = vld [vmem:[%s3 + $0x10] sm:$0xf]
      %v324 = vld [vmem:[%s3 + $0x14] sm:$0xf]
      %v325 = vld [vmem:[%s3 + $0x18] sm:$0xf]
      %v326 = vld [vmem:[%s3 + $0x1c] sm:$0xf]
      %v327 = vld [vmem:[%s3 + $0x20] sm:$0xf]
      %v328 = vld [vmem:[%s3 + $0x24] sm:$0xf]
      %v329 = vld [vmem:[%s3 + $0x28] sm:$0xf]
      %v330 = vld [vmem:[%s3 + $0x2c] sm:$0xf]
      %v331 = vld [vmem:[%s3 + $0x30] sm:$0xf]
      %v332 = vld [vmem:[%s3 + $0x34] sm:$0xf]
      %v333 = vld [vmem:[%s3 + $0x38] sm:$0xf]
      %v334 = vld [vmem:[%s3 + $0x3c] sm:$0xf]
      %v351 = vunpack.c.l.b16 %v319
      %v352 = vunpack.c.l.b16 %v320
      %v353 = vunpack.c.l.b16 %v321
      %v354 = vunpack.c.l.b16 %v322
      %v355 = vunpack.c.l.b16 %v323
      %v356 = vunpack.c.l.b16 %v324
      %v357 = vunpack.c.l.b16 %v325
      %v358 = vunpack.c.l.b16 %v326
      %v359 = vunpack.c.l.b16 %v327
      %v360 = vunpack.c.l.b16 %v328
      %v361 = vunpack.c.l.b16 %v329
      %v362 = vunpack.c.l.b16 %v330
      %v363 = vunpack.c.l.b16 %v331
      %v364 = vunpack.c.l.b16 %v332
      %v365 = vunpack.c.l.b16 %v333
      %v366 = vunpack.c.l.b16 %v334
      %v367 = vpack.c.b16 %v352, %v351
      %v368 = vpack.c.b16 %v354, %v353
      %v369 = vpack.c.b16 %v356, %v355
      %v370 = vpack.c.b16 %v358, %v357
      %v371 = vpack.c.b16 %v360, %v359
      %v372 = vpack.c.b16 %v362, %v361
      %v373 = vpack.c.b16 %v364, %v363
      %v374 = vpack.c.b16 %v366, %v365
      %383 = vmatprep.subr.bf16.mxu0 0
      %384 = vmatpush1.bf16.msra.mxu0 %v367
      %385 = vmatprep.subr.bf16.mxu0 0
      %386 = vmatpush1.bf16.msra.mxu0 %v368
      %387 = vmatprep.subr.bf16.mxu0 0
      %388 = vmatpush1.bf16.msra.mxu0 %v369
      %389 = vmatprep.subr.bf16.mxu0 0
      %390 = vmatpush1.bf16.msra.mxu0 %v370
      %391 = vmatprep.subr.bf16.mxu0 0
      %392 = vmatpush1.bf16.msra.mxu0 %v371
      %393 = vmatprep.subr.bf16.mxu0 0
      %394 = vmatpush1.bf16.msra.mxu0 %v372
      %395 = vmatprep.subr.bf16.mxu0 0
      %396 = vmatpush1.bf16.msra.mxu0 %v373
      %397 = vmatprep.subr.bf16.mxu0 0
      %398 = vmatpush1.bf16.msra.mxu0 %v374
      %399 = vmatprep.subr.bf16.mxu0 0
      %400 = vmatpush1.bf16.msra.mxu0 0
      %401 = vmatprep.subr.bf16.mxu0 0
      %402 = vmatpush1.bf16.msra.mxu0 0
      %403 = vmatprep.subr.bf16.mxu0 0
      %404 = vmatpush1.bf16.msra.mxu0 0
      %405 = vmatprep.subr.bf16.mxu0 0
      %406 = vmatpush1.bf16.msra.mxu0 0
      %407 = vmatprep.subr.bf16.mxu0 0
      %408 = vmatpush1.bf16.msra.mxu0 0
      %409 = vmatprep.subr.bf16.mxu0 0
      %410 = vmatpush1.bf16.msra.mxu0 0
      %411 = vmatprep.subr.bf16.mxu0 0
      %412 = vmatpush1.bf16.msra.mxu0 0
      %413 = vmatprep.subr.bf16.mxu0 0
      %414 = vmatpush1.bf16.msra.mxu0 0
      %415 = vmatprep.mubr.bf16.mxu0 0
      %416 = vmatmul.mubr.bf16.gmra.mrb[0].mxu0 %v318
      %v417 = vpop.f32.mrb[0].mxu0
      %v418 = vadd.f32 0.0, %v417
      %v419 = vpop.f32.mrb[0].mxu0
      %v420 = vpop.f32.mrb[0].mxu0
      %v421 = vpop.f32.mrb[0].mxu0
      %422 = vdwg.mxu0
      %v423 = vmul.f32 %v418, %v313
      %v424 = vpack.c.bf16 %v423, %v423
      %v425 = vld [vmem:[%s4] sm:$0xf]
      %v426 = vld [vmem:[%s4 + $0x4] sm:$0xf]
      %v427 = vld [vmem:[%s4 + $0x8] sm:$0xf]
      %v428 = vld [vmem:[%s4 + $0xc] sm:$0xf]
      %v429 = vld [vmem:[%s4 + $0x10] sm:$0xf]
      %v430 = vld [vmem:[%s4 + $0x14] sm:$0xf]
      %v431 = vld [vmem:[%s4 + $0x18] sm:$0xf]
      %v432 = vld [vmem:[%s4 + $0x1c] sm:$0xf]
      %v441 = vunpack.c.l.b16 %v425
      %v442 = vunpack.c.l.b16 %v426
      %v443 = vunpack.c.l.b16 %v427
      %v444 = vunpack.c.l.b16 %v428
      %v445 = vunpack.c.l.b16 %v429
      %v446 = vunpack.c.l.b16 %v430
      %v447 = vunpack.c.l.b16 %v431
      %v448 = vunpack.c.l.b16 %v432
      %v449 = vpack.c.b16 %v442, %v441
      %v450 = vpack.c.b16 %v444, %v443
      %v451 = vpack.c.b16 %v446, %v445
      %v452 = vpack.c.b16 %v448, %v447
      %vm457 = vcmask 523264
      %v459 = vsel %vm457, %v424, 0
      %461 = vmatprep.subr.bf16.mxu0 0
      %462 = vmatpush1.bf16.msra.mxu0 %v449
      %463 = vmatprep.subr.bf16.mxu0 0
      %464 = vmatpush1.bf16.msra.mxu0 %v450
      %465 = vmatprep.subr.bf16.mxu0 0
      %466 = vmatpush1.bf16.msra.mxu0 %v451
      %467 = vmatprep.subr.bf16.mxu0 0
      %468 = vmatpush1.bf16.msra.mxu0 %v452
      %469 = vmatprep.subr.bf16.mxu0 0
      %470 = vmatpush1.bf16.msra.mxu0 0
      %471 = vmatprep.subr.bf16.mxu0 0
      %472 = vmatpush1.bf16.msra.mxu0 0
      %473 = vmatprep.subr.bf16.mxu0 0
      %474 = vmatpush1.bf16.msra.mxu0 0
      %475 = vmatprep.subr.bf16.mxu0 0
      %476 = vmatpush1.bf16.msra.mxu0 0
      %477 = vmatprep.subr.bf16.mxu0 0
      %478 = vmatpush1.bf16.msra.mxu0 0
      %479 = vmatprep.subr.bf16.mxu0 0
      %480 = vmatpush1.bf16.msra.mxu0 0
      %481 = vmatprep.subr.bf16.mxu0 0
      %482 = vmatpush1.bf16.msra.mxu0 0
      %483 = vmatprep.subr.bf16.mxu0 0
      %484 = vmatpush1.bf16.msra.mxu0 0
      %485 = vmatprep.subr.bf16.mxu0 0
      %486 = vmatpush1.bf16.msra.mxu0 0
      %487 = vmatprep.subr.bf16.mxu0 0
      %488 = vmatpush1.bf16.msra.mxu0 0
      %489 = vmatprep.subr.bf16.mxu0 0
      %490 = vmatpush1.bf16.msra.mxu0 0
      %491 = vmatprep.subr.bf16.mxu0 0
      %492 = vmatpush1.bf16.msra.mxu0 0
      %493 = vmatprep.mubr.bf16.mxu0 0
      %494 = vmatmul.mubr.bf16.gmra.mrb[0].mxu0 %v459
      %v495 = vpop.f32.mrb[0].mxu0
      %v496 = vadd.f32 0.0, %v495
      %v497 = vpop.f32.mrb[0].mxu0
      %v498 = vpop.f32.mrb[0].mxu0
      %v499 = vpop.f32.mrb[0].mxu0
      %500 = vdwg.mxu0
      %v501 = vmul.f32 %v496, %v313
      %v502 = vpack.c.bf16 %v501, %v501
      %v503 = vld [vmem:[%s5] sm:$0xf]
      %v504 = vld [vmem:[%s5 + $0x4] sm:$0xf]
      %v505 = vld [vmem:[%s5 + $0x8] sm:$0xf]
      %v506 = vld [vmem:[%s5 + $0xc] sm:$0xf]
      %v507 = vld [vmem:[%s5 + $0x10] sm:$0xf]
      %v508 = vld [vmem:[%s5 + $0x14] sm:$0xf]
      %v509 = vld [vmem:[%s5 + $0x18] sm:$0xf]
      %v510 = vld [vmem:[%s5 + $0x1c] sm:$0xf]
      %v511 = vunpack.c.l.bf16 %v318
      %v520 = vunpack.c.l.b16 %v503
      %v521 = vunpack.c.l.b16 %v504
      %v522 = vunpack.c.l.b16 %v505
      %v523 = vunpack.c.l.b16 %v506
      %v524 = vunpack.c.l.b16 %v507
      %v525 = vunpack.c.l.b16 %v508
      %v526 = vunpack.c.l.b16 %v509
      %v527 = vunpack.c.l.b16 %v510
      %v528 = vpack.c.b16 %v521, %v520
      %v529 = vpack.c.b16 %v523, %v522
      %v530 = vpack.c.b16 %v525, %v524
      %v531 = vpack.c.b16 %v527, %v526
      %v537 = vsel %vm457, %v502, 0
      %539 = vmatprep.subr.bf16.mxu0 0
      %540 = vmatpush1.bf16.msra.mxu0 %v528
      %541 = vmatprep.subr.bf16.mxu0 0
      %542 = vmatpush1.bf16.msra.mxu0 %v529
      %543 = vmatprep.subr.bf16.mxu0 0
      %544 = vmatpush1.bf16.msra.mxu0 %v530
      %545 = vmatprep.subr.bf16.mxu0 0
      %546 = vmatpush1.bf16.msra.mxu0 %v531
      %547 = vmatprep.subr.bf16.mxu0 0
      %548 = vmatpush1.bf16.msra.mxu0 0
      %549 = vmatprep.subr.bf16.mxu0 0
      %550 = vmatpush1.bf16.msra.mxu0 0
      %551 = vmatprep.subr.bf16.mxu0 0
      %552 = vmatpush1.bf16.msra.mxu0 0
      %553 = vmatprep.subr.bf16.mxu0 0
      %554 = vmatpush1.bf16.msra.mxu0 0
      %555 = vmatprep.subr.bf16.mxu0 0
      %556 = vmatpush1.bf16.msra.mxu0 0
      %557 = vmatprep.subr.bf16.mxu0 0
      %558 = vmatpush1.bf16.msra.mxu0 0
      %559 = vmatprep.subr.bf16.mxu0 0
      %560 = vmatpush1.bf16.msra.mxu0 0
      %561 = vmatprep.subr.bf16.mxu0 0
      %562 = vmatpush1.bf16.msra.mxu0 0
      %563 = vmatprep.subr.bf16.mxu0 0
      %564 = vmatpush1.bf16.msra.mxu0 0
      %565 = vmatprep.subr.bf16.mxu0 0
      %566 = vmatpush1.bf16.msra.mxu0 0
      %567 = vmatprep.subr.bf16.mxu0 0
      %568 = vmatpush1.bf16.msra.mxu0 0
      %569 = vmatprep.subr.bf16.mxu0 0
      %570 = vmatpush1.bf16.msra.mxu0 0
      %571 = vmatprep.mubr.bf16.mxu0 0
      %572 = vmatmul.mubr.bf16.gmra.mrb[0].mxu0 %v537
      %v573 = vpop.f32.mrb[0].mxu0
      %v574 = vadd.f32 %v511, %v573
      %v575 = vpop.f32.mrb[0].mxu0
      %v576 = vpop.f32.mrb[0].mxu0
      %v577 = vpop.f32.mrb[0].mxu0
      %578 = vdwg.mxu0
      %579 = vst [vmem:[%s263] sm:$0xff] %v574
      %p580 = scmp.lt.s32.totalorder %s17, 3
      %s581 = scalar_select %p580, %s17, 3
      %s582 = smul.addr %s581, 8
      %s583 = scalar_lea.vmem %s6, %s582
      // Predicated region
      $region45: #{_lambda_.3} parent=43 // pred_check
        %p584 = pneg %p171
      $region46: #{_lambda_.3} parent=43 // pred_check_branch
        %586 = sbr.rel (%p584) target = $region48
      $region47: #{_lambda_.3} parent=43 // pred_region
        _
      $region48: #{_lambda_.3} parent=43 // pred_fallthru
        _
    $region44: #{_lambda_.3} parent=5 // pred_fallthru
      _
    %p587 = scmp.le.s32.totalorder 2, %s12
    // Predicated region
    $region49: #{_lambda_.3} parent=5 // pred_check
      %p588 = pneg %p587
    $region50: #{_lambda_.3} parent=5 // pred_check_branch
      %590 = sbr.rel (%p588) target = $region52
    $region51: #{_lambda_.3} parent=5 // pred_region
      %s591 = ssub.s32 %s12, 2
      // Predicated region
      $region53: #{_lambda_.3} parent=51 // pred_check
        %p592 = pneg %p177
      $region54: #{_lambda_.3} parent=51 // pred_check_branch
        %594 = sbr.rel (%p592) target = $region56
      $region55: #{_lambda_.3} parent=51 // pred_region
        %p595 = scmp.lt.s32.totalorder %s18, 3
        %s596 = scalar_select %p595, %s18, 3
        %s597 = smul.addr %s596, 8
        %s598 = scalar_lea.vmem %s6, %s597
      $region56: #{_lambda_.3} parent=51 // pred_fallthru
        _
    $region52: #{_lambda_.3} parent=5 // pred_fallthru
      _
  $region6: #{_lambda_.3} parent=0 // loop_footer
    %s16 = sadd.s32 1, %s12
  $region7: #{_lambda_.3} parent=0 // loop_footer_branch
    %11 = sbr.rel target = $region3
  $region8: #{_lambda_.3} parent=0 // loop_exit
    _

</llo_original>
